<compile_context>
chip_gen: v6e
topology: v6e:2x2x1
jax: 0.10.0
libtpu: 0.0.40
codegen_flags: <defaults>
</compile_context>

<pallas_src>
import math
from functools import partial

import jax
import jax.numpy as jnp
import numpy as np
from jax.experimental import pallas as pl
from jax.experimental.pallas import tpu as pltpu


def _conv3x3_relu_kernel(xb_ref, xt_ref, xbt_ref, w_ref, o_ref, xr_ref, acc_ref,
                         *, TH, W, Cin, Cout):
    """One (batch, row-tile) step of the fused 3x3 conv + ReLU.

    xb_ref : (1, TH, W, Cin)   body rows of the tile
    xt_ref : (1, 1, W, Cin)    row above the tile (clamped at the border)
    xbt_ref: (1, 1, W, Cin)    row below the tile (clamped at the border)
    w_ref  : (3*Cin, 3*Cout)   fused weights, bf16, resident in VMEM
    o_ref  : (1, TH, W, Cout)  output tile
    xr_ref : (TH*W, 3*Cin)     bf16 H-direction im2col scratch
    acc_ref: (TH, W, Cout)     f32 accumulator scratch
    """
    t = pl.program_id(1)
    n_t = pl.num_programs(1)

    # Body rows flattened to (TH*W, Cin); cast to bf16 for the MXU.
    xb2d = xb_ref[0].reshape(TH * W, Cin).astype(jnp.bfloat16)

    # Halo rows; zero them when the tile touches the top/bottom image border.
    top = xt_ref[0, 0]
    bot = xbt_ref[0, 0]
    top = top * jnp.where(t == 0, 0.0, 1.0).astype(top.dtype)
    bot = bot * jnp.where(t == n_t - 1, 0.0, 1.0).astype(bot.dtype)
    top = top.astype(jnp.bfloat16)
    bot = bot.astype(jnp.bfloat16)

    # Assemble the H-direction im2col:
    #   xr[h*W + w, kh*Cin:(kh+1)*Cin] = x[tile_row h + kh - 1, col w, :]
    # Only row-offset (multiples of W) and lane-offset stores — no per-tap
    # strided reshape copies.
    xr_ref[:, Cin:2 * Cin] = xb2d                                      # kh = 1
    xr_ref[0:W, 0:Cin] = top                                           # kh = 0, h = 0
    if TH > 1:
        xr_ref[W:TH * W, 0:Cin] = xb2d[0:(TH - 1) * W, :]              # kh = 0, h >= 1
        xr_ref[0:(TH - 1) * W, 2 * Cin:3 * Cin] = xb2d[W:TH * W, :]    # kh = 2, h <= TH-2
    xr_ref[(TH - 1) * W:TH * W, 2 * Cin:3 * Cin] = bot                 # kh = 2, h = TH-1

    # One fat MXU matmul: (TH*W, 3*Cin) @ (3*Cin, 3*Cout), f32 accumulation.
    p = jnp.dot(xr_ref[...], w_ref[...], preferred_element_type=jnp.float32)

    # Output lane block kw holds the column-tap kw result; apply the +-1
    # column shifts (with zero padding at the left/right image border).
    p0 = p[:, 0:Cout].reshape(TH, W, Cout)              # kw = 0 -> needs col w-1
    p1 = p[:, Cout:2 * Cout].reshape(TH, W, Cout)       # kw = 1 -> col w
    p2 = p[:, 2 * Cout:3 * Cout].reshape(TH, W, Cout)   # kw = 2 -> col w+1

    acc_ref[...] = p1
    if W > 1:
        acc_ref[:, 1:W, :] = acc_ref[:, 1:W, :] + p0[:, 0:W - 1, :]
        acc_ref[:, 0:W - 1, :] = acc_ref[:, 0:W - 1, :] + p2[:, 1:W, :]

    o_ref[0] = jnp.maximum(acc_ref[...], 0.0).astype(o_ref.dtype)


def _pick_tile_rows(H, W, Cin, Cout, budget_bytes):
    """Largest divisor of H whose per-tile VMEM footprint fits the budget."""
    def est(th):
        m = th * W
        b = 0
        b += 2 * th * W * Cin * 4            # body block, double-buffered (f32)
        b += 2 * 2 * W * Cin * 4             # two halo-row blocks, double-buffered
        b += 2 * th * W * Cout * 4           # output block, double-buffered (f32)
        b += 2 * (3 * Cin) * (3 * Cout) * 2  # weights (bf16)
        b += m * 3 * Cin * 2                 # im2col scratch (bf16)
        b += m * Cout * 4                    # f32 accumulator scratch
        b += 2 * m * 3 * Cout * 4            # matmul result + epilogue temps
        return b

    best = 1
    for th in range(1, H + 1):
        if H % th == 0 and est(th) <= budget_bytes:
            best = th
    return best


def conv_relu_block(x_nchw, w_oihw):
    """relu(conv2d(x, w, stride=1, padding=1, bias=False)); NCHW in/out."""
    N, Cin, H, W = x_nchw.shape
    Cout, Cin_w, KH, KW = w_oihw.shape
    assert (KH, KW) == (3, 3) and Cin_w == Cin

    # NHWC inside the kernel so channels map to the TPU lane axis.
    x = jnp.transpose(x_nchw, (0, 2, 3, 1))

    # Keep W a multiple of 8 (sublane granularity).  The extra zero columns
    # reproduce the conv's own zero padding and are cropped at the end.
    # (Not hit for typical SR widths, including the 16-wide test input.)
    W_in = W
    if W % 8 != 0:
        W = ((W + 7) // 8) * 8
        x = jnp.pad(x, ((0, 0), (0, 0), (0, W - W_in), (0, 0)))

    # Fuse the 3x3 weights: HWIO -> (kh, cin, kw, cout) -> (3*Cin, 3*Cout),
    # cast to bf16 once outside the kernel (MXU operands; f32 accumulation).
    w_hwio = jnp.transpose(w_oihw, (2, 3, 1, 0))
    w_all = jnp.transpose(w_hwio, (0, 2, 1, 3)).reshape(3 * Cin, 3 * Cout)
    w_all = w_all.astype(jnp.bfloat16)

    TH = _pick_tile_rows(H, W, Cin, Cout, budget_bytes=20 * 1024 * 1024)
    grid = (N, H // TH)

    kernel = partial(_conv3x3_relu_kernel, TH=TH, W=W, Cin=Cin, Cout=Cout)

    out = pl.pallas_call(
        kernel,
        out_shape=jax.ShapeDtypeStruct((N, H, W, Cout), x.dtype),
        grid_spec=pltpu.PrefetchScalarGridSpec(
            num_scalar_prefetch=0,
            grid=grid,
            in_specs=[
                # Body rows of this tile.
                pl.BlockSpec((1, TH, W, Cin), lambda n, t: (n, t, 0, 0)),
                # One-row top halo (clamped at the border; zeroed in-kernel).
                pl.BlockSpec((1, 1, W, Cin),
                             lambda n, t: (n, jnp.maximum(t * TH - 1, 0), 0, 0)),
                # One-row bottom halo.
                pl.BlockSpec((1, 1, W, Cin),
                             lambda n, t: (n, jnp.minimum(t * TH + TH, H - 1), 0, 0)),
                # Fused weights: constant index map -> stay resident in VMEM.
                pl.BlockSpec((3 * Cin, 3 * Cout), lambda n, t: (0, 0)),
            ],
            out_specs=pl.BlockSpec((1, TH, W, Cout), lambda n, t: (n, t, 0, 0)),
            scratch_shapes=[
                pltpu.VMEM((TH * W, 3 * Cin), jnp.bfloat16),   # H-im2col
                pltpu.VMEM((TH, W, Cout), jnp.float32),        # f32 accumulator
            ],
        ),
        compiler_params=pltpu.CompilerParams(
            dimension_semantics=("parallel", "parallel"),
            vmem_limit_bytes=40 * 1024 * 1024,
        ),
    )(x, x, x, w_all)

    out = out[:, :, :W_in, :]
    return jnp.transpose(out, (0, 3, 1, 2))  # back to NCHW


if __name__ == "__main__":
    key = jax.random.PRNGKey(0)
    k_w, k_x = jax.random.split(key)

    # Shapes consistent with the module: in_channels = out_channels = 64.
    N, C, H, W = 2, 64, 16, 16
    x = jax.random.normal(k_x, (N, C, H, W), jnp.float32)
    w = jax.random.normal(k_w, (64, C, 3, 3), jnp.float32) * math.sqrt(2.0 / (3 * 3 * 64))

    fwd = jax.jit(conv_relu_block)
    out = jax.block_until_ready(fwd(x, w))

    assert out.shape == (N, 64, H, W), out.shape
    assert out.dtype == jnp.float32

    # Reference (f32 conv + ReLU).  The kernel uses bf16 MXU operands with f32
    # accumulation, so compare with a loose tolerance.
    ref = jax.lax.conv_general_dilated(
        x, w, window_strides=(1, 1), padding="SAME",
        dimension_numbers=("NCHW", "OIHW", "NCHW"),
        precision=jax.lax.Precision.HIGHEST)
    ref = jnp.maximum(ref, 0.0)
    np.testing.assert_allclose(np.asarray(out), np.asarray(ref), atol=0.1, rtol=0.1)

    print("KERNEL_OK")
</pallas_src>

<mosaic_0001>
module attributes {stable_mosaic.version = 11 : i64} {
  func.func @_conv3x3_relu_kernel(%arg0: i32, %arg1: i32, %arg2: memref<1x16x16x64xf32, #tpu.memory_space<vmem>>, %arg3: memref<1x1x16x64xf32, #tpu.memory_space<vmem>>, %arg4: memref<1x1x16x64xf32, #tpu.memory_space<vmem>>, %arg5: memref<192x192xbf16, #tpu.memory_space<vmem>>, %arg6: memref<1x16x16x64xf32, #tpu.memory_space<vmem>>, %arg7: memref<256x192xbf16, #tpu.memory_space<vmem>>, %arg8: memref<16x16x64xf32, #tpu.memory_space<vmem>>) attributes {dimension_semantics = [#tpu.dimension_semantics<parallel>, #tpu.dimension_semantics<parallel>], iteration_bounds = array<i64: 2, 1>, scalar_prefetch = 0 : i64, scratch_operands = 2 : i64, tpu.core_type = #tpu.core_type<tc>, window_params = [{transform_indices = @transform_0, window_bounds = array<i64: 1, 16, 16, 64>}, {transform_indices = @transform_1, window_bounds = array<i64: 1, 1, 16, 64>}, {transform_indices = @transform_2, window_bounds = array<i64: 1, 1, 16, 64>}, {pipeline_mode = #tpu.pipeline_mode<synchronous>, transform_indices = @transform_3, window_bounds = array<i64: 192, 192>}, {transform_indices = @transform_4, window_bounds = array<i64: 1, 16, 16, 64>}]} {
    %c0 = arith.constant 0 : index
    %c0_0 = arith.constant 0 : index
    %c0_1 = arith.constant 0 : index
    %c0_2 = arith.constant 0 : index
    %0 = vector.load %arg2[%c0, %c0_0, %c0_1, %c0_2] : memref<1x16x16x64xf32, #tpu.memory_space<vmem>>, vector<1x16x16x64xf32>
    %1 = vector.shape_cast %0 : vector<1x16x16x64xf32> to vector<16x16x64xf32>
    %2 = vector.shape_cast %1 : vector<16x16x64xf32> to vector<256x64xf32>
    %3 = arith.truncf %2 : vector<256x64xf32> to vector<256x64xbf16>
    %c0_3 = arith.constant 0 : index
    %c0_4 = arith.constant 0 : index
    %c0_5 = arith.constant 0 : index
    %c0_6 = arith.constant 0 : index
    %4 = vector.load %arg3[%c0_3, %c0_4, %c0_5, %c0_6] : memref<1x1x16x64xf32, #tpu.memory_space<vmem>>, vector<1x1x16x64xf32>
    %5 = vector.shape_cast %4 : vector<1x1x16x64xf32> to vector<16x64xf32>
    %c0_7 = arith.constant 0 : index
    %c0_8 = arith.constant 0 : index
    %c0_9 = arith.constant 0 : index
    %c0_10 = arith.constant 0 : index
    %6 = vector.load %arg4[%c0_7, %c0_8, %c0_9, %c0_10] : memref<1x1x16x64xf32, #tpu.memory_space<vmem>>, vector<1x1x16x64xf32>
    %7 = vector.shape_cast %6 : vector<1x1x16x64xf32> to vector<16x64xf32>
    %c0_i32 = arith.constant 0 : i32
    %8 = arith.cmpi eq, %arg1, %c0_i32 : i32
    %cst = arith.constant 0.000000e+00 : f32
    %cst_11 = arith.constant 1.000000e+00 : f32
    %9 = arith.select %8, %cst, %cst_11 : f32
    %10 = vector.broadcast %9 : f32 to vector<16x64xf32>
    %11 = arith.mulf %5, %10 : vector<16x64xf32>
    %c0_i32_12 = arith.constant 0 : i32
    %12 = arith.cmpi eq, %arg1, %c0_i32_12 : i32
    %cst_13 = arith.constant 0.000000e+00 : f32
    %cst_14 = arith.constant 1.000000e+00 : f32
    %13 = arith.select %12, %cst_13, %cst_14 : f32
    %14 = vector.broadcast %13 : f32 to vector<16x64xf32>
    %15 = arith.mulf %7, %14 : vector<16x64xf32>
    %16 = arith.truncf %11 : vector<16x64xf32> to vector<16x64xbf16>
    %17 = arith.truncf %15 : vector<16x64xf32> to vector<16x64xbf16>
    %c0_15 = arith.constant 0 : index
    %c64 = arith.constant 64 : index
    %18 = vector.load %arg7[%c0_15, %c64] : memref<256x192xbf16, #tpu.memory_space<vmem>>, vector<256x64xbf16>
    tpu.vector_store %arg7[%c0_15, %c64], %3 {strides = array<i32>} : memref<256x192xbf16, #tpu.memory_space<vmem>>, vector<256x64xbf16>,
    %c0_16 = arith.constant 0 : index
    %c0_17 = arith.constant 0 : index
    %19 = vector.load %arg7[%c0_16, %c0_17] : memref<256x192xbf16, #tpu.memory_space<vmem>>, vector<16x64xbf16>
    tpu.vector_store %arg7[%c0_16, %c0_17], %16 {strides = array<i32>} : memref<256x192xbf16, #tpu.memory_space<vmem>>, vector<16x64xbf16>,
    %20 = vector.extract_strided_slice %3 {offsets = [0, 0], sizes = [240, 64], strides = [1, 1]} : vector<256x64xbf16> to vector<240x64xbf16>
    %c16 = arith.constant 16 : index
    %c0_18 = arith.constant 0 : index
    %21 = vector.load %arg7[%c16, %c0_18] : memref<256x192xbf16, #tpu.memory_space<vmem>>, vector<240x64xbf16>
    tpu.vector_store %arg7[%c16, %c0_18], %20 {strides = array<i32>} : memref<256x192xbf16, #tpu.memory_space<vmem>>, vector<240x64xbf16>,
    %22 = vector.extract_strided_slice %3 {offsets = [16, 0], sizes = [240, 64], strides = [1, 1]} : vector<256x64xbf16> to vector<240x64xbf16>
    %c0_19 = arith.constant 0 : index
    %c128 = arith.constant 128 : index
    %23 = vector.load %arg7[%c0_19, %c128] : memref<256x192xbf16, #tpu.memory_space<vmem>>, vector<240x64xbf16>
    tpu.vector_store %arg7[%c0_19, %c128], %22 {strides = array<i32>} : memref<256x192xbf16, #tpu.memory_space<vmem>>, vector<240x64xbf16>,
    %c240 = arith.constant 240 : index
    %c128_20 = arith.constant 128 : index
    %24 = vector.load %arg7[%c240, %c128_20] : memref<256x192xbf16, #tpu.memory_space<vmem>>, vector<16x64xbf16>
    tpu.vector_store %arg7[%c240, %c128_20], %17 {strides = array<i32>} : memref<256x192xbf16, #tpu.memory_space<vmem>>, vector<16x64xbf16>,
    %c0_21 = arith.constant 0 : index
    %c0_22 = arith.constant 0 : index
    %25 = vector.load %arg7[%c0_21, %c0_22] : memref<256x192xbf16, #tpu.memory_space<vmem>>, vector<256x192xbf16>
    %c0_23 = arith.constant 0 : index
    %c0_24 = arith.constant 0 : index
    %26 = vector.load %arg5[%c0_23, %c0_24] : memref<192x192xbf16, #tpu.memory_space<vmem>>, vector<192x192xbf16>
    %cst_25 = arith.constant dense<0.000000e+00> : vector<256x192xf32>
    %27 = tpu.matmul %25, %26, %cst_25 {dimension_numbers = #tpu.dot_dimension_numbers<[1], [0], [0], [1], [0, 0, 1, 1], [], []>} : vector<256x192xbf16>, vector<192x192xbf16>, vector<256x192xf32> -> vector<256x192xf32>
    %28 = vector.extract_strided_slice %27 {offsets = [0, 0], sizes = [256, 64], strides = [1, 1]} : vector<256x192xf32> to vector<256x64xf32>
    %29 = vector.shape_cast %28 : vector<256x64xf32> to vector<16x16x64xf32>
    %30 = vector.extract_strided_slice %27 {offsets = [0, 64], sizes = [256, 64], strides = [1, 1]} : vector<256x192xf32> to vector<256x64xf32>
    %31 = vector.shape_cast %30 : vector<256x64xf32> to vector<16x16x64xf32>
    %32 = vector.extract_strided_slice %27 {offsets = [0, 128], sizes = [256, 64], strides = [1, 1]} : vector<256x192xf32> to vector<256x64xf32>
    %33 = vector.shape_cast %32 : vector<256x64xf32> to vector<16x16x64xf32>
    %c0_26 = arith.constant 0 : index
    %c0_27 = arith.constant 0 : index
    %c0_28 = arith.constant 0 : index
    %34 = vector.load %arg8[%c0_26, %c0_27, %c0_28] : memref<16x16x64xf32, #tpu.memory_space<vmem>>, vector<16x16x64xf32>
    tpu.vector_store %arg8[%c0_26, %c0_27, %c0_28], %31 {strides = array<i32>} : memref<16x16x64xf32, #tpu.memory_space<vmem>>, vector<16x16x64xf32>,
    %c0_29 = arith.constant 0 : index
    %c1 = arith.constant 1 : index
    %c0_30 = arith.constant 0 : index
    %35 = vector.load %arg8[%c0_29, %c1, %c0_30] : memref<16x16x64xf32, #tpu.memory_space<vmem>>, vector<16x15x64xf32>
    %36 = vector.extract_strided_slice %29 {offsets = [0, 0, 0], sizes = [16, 15, 64], strides = [1, 1, 1]} : vector<16x16x64xf32> to vector<16x15x64xf32>
    %37 = arith.addf %35, %36 : vector<16x15x64xf32>
    %c0_31 = arith.constant 0 : index
    %c1_32 = arith.constant 1 : index
    %c0_33 = arith.constant 0 : index
    %38 = vector.load %arg8[%c0_31, %c1_32, %c0_33] : memref<16x16x64xf32, #tpu.memory_space<vmem>>, vector<16x15x64xf32>
    tpu.vector_store %arg8[%c0_31, %c1_32, %c0_33], %37 {strides = array<i32>} : memref<16x16x64xf32, #tpu.memory_space<vmem>>, vector<16x15x64xf32>,
    %c0_34 = arith.constant 0 : index
    %c0_35 = arith.constant 0 : index
    %c0_36 = arith.constant 0 : index
    %39 = vector.load %arg8[%c0_34, %c0_35, %c0_36] : memref<16x16x64xf32, #tpu.memory_space<vmem>>, vector<16x15x64xf32>
    %40 = vector.extract_strided_slice %33 {offsets = [0, 1, 0], sizes = [16, 15, 64], strides = [1, 1, 1]} : vector<16x16x64xf32> to vector<16x15x64xf32>
    %41 = arith.addf %39, %40 : vector<16x15x64xf32>
    %c0_37 = arith.constant 0 : index
    %c0_38 = arith.constant 0 : index
    %c0_39 = arith.constant 0 : index
    %42 = vector.load %arg8[%c0_37, %c0_38, %c0_39] : memref<16x16x64xf32, #tpu.memory_space<vmem>>, vector<16x15x64xf32>
    tpu.vector_store %arg8[%c0_37, %c0_38, %c0_39], %41 {strides = array<i32>} : memref<16x16x64xf32, #tpu.memory_space<vmem>>, vector<16x15x64xf32>,
    %c0_40 = arith.constant 0 : index
    %c0_41 = arith.constant 0 : index
    %c0_42 = arith.constant 0 : index
    %43 = vector.load %arg8[%c0_40, %c0_41, %c0_42] : memref<16x16x64xf32, #tpu.memory_space<vmem>>, vector<16x16x64xf32>
    %cst_43 = arith.constant 0.000000e+00 : f32
    %44 = vector.broadcast %cst_43 : f32 to vector<16x16x64xf32>
    %45 = arith.maximumf %43, %44 : vector<16x16x64xf32>
    %c0_44 = arith.constant 0 : index
    %c0_45 = arith.constant 0 : index
    %c0_46 = arith.constant 0 : index
    %c0_47 = arith.constant 0 : index
    %46 = vector.load %arg6[%c0_44, %c0_45, %c0_46, %c0_47] : memref<1x16x16x64xf32, #tpu.memory_space<vmem>>, vector<1x16x16x64xf32>
    %47 = vector.shape_cast %46 : vector<1x16x16x64xf32> to vector<16x16x64xf32>
    %48 = vector.shape_cast %45 : vector<16x16x64xf32> to vector<1x16x16x64xf32>
    tpu.vector_store %arg6[%c0_44, %c0_45, %c0_46, %c0_47], %48 {strides = array<i32>} : memref<1x16x16x64xf32, #tpu.memory_space<vmem>>, vector<1x16x16x64xf32>,
    return
  }
  func.func @transform_0(%arg0: i32, %arg1: i32) -> (i32, i32, i32, i32) {
    %c0_i32 = arith.constant 0 : i32
    %c0_i32_0 = arith.constant 0 : i32
    %c0_i32_1 = arith.constant 0 : i32
    return %arg0, %arg1, %c0_i32, %c0_i32_0 : i32, i32, i32, i32
  }
  func.func @transform_1(%arg0: i32, %arg1: i32) -> (i32, i32, i32, i32) {
    %c16_i32 = arith.constant 16 : i32
    %0 = arith.muli %arg1, %c16_i32 : i32
    %c1_i32 = arith.constant 1 : i32
    %1 = arith.subi %0, %c1_i32 : i32
    %c0_i32 = arith.constant 0 : i32
    %2 = arith.maxsi %1, %c0_i32 : i32
    %c0_i32_0 = arith.constant 0 : i32
    %c0_i32_1 = arith.constant 0 : i32
    %c0_i32_2 = arith.constant 0 : i32
    return %arg0, %2, %c0_i32_0, %c0_i32_1 : i32, i32, i32, i32
  }
  func.func @transform_2(%arg0: i32, %arg1: i32) -> (i32, i32, i32, i32) {
    %c16_i32 = arith.constant 16 : i32
    %0 = arith.muli %arg1, %c16_i32 : i32
    %c16_i32_0 = arith.constant 16 : i32
    %1 = arith.addi %0, %c16_i32_0 : i32
    %c15_i32 = arith.constant 15 : i32
    %2 = arith.minsi %1, %c15_i32 : i32
    %c0_i32 = arith.constant 0 : i32
    %c0_i32_1 = arith.constant 0 : i32
    %c0_i32_2 = arith.constant 0 : i32
    return %arg0, %2, %c0_i32, %c0_i32_1 : i32, i32, i32, i32
  }
  func.func @transform_3(%arg0: i32, %arg1: i32) -> (i32, i32) {
    %c0_i32 = arith.constant 0 : i32
    %c0_i32_0 = arith.constant 0 : i32
    %c0_i32_1 = arith.constant 0 : i32
    return %c0_i32, %c0_i32_0 : i32, i32
  }
  func.func @transform_4(%arg0: i32, %arg1: i32) -> (i32, i32, i32, i32) {
    %c0_i32 = arith.constant 0 : i32
    %c0_i32_0 = arith.constant 0 : i32
    %c0_i32_1 = arith.constant 0 : i32
    return %arg0, %arg1, %c0_i32, %c0_i32_0 : i32, i32, i32, i32
  }
}

</mosaic_0001>

<llo_original>
// kernel: conv_relu_block.1
$region0: #{conv_relu_block.1}
  #allocation0 [shape = 'u32[]', space=smem, size = 0x4, offset = 0x4, fixed_abs, tag = 'smem constant byte address 0x4 - core index']
  #allocation1 [shape = 'u32[144,128]{1,0:T(1,128)}', space=vmem, size = 0x12000, scoped, tag = 'internal scratch']
  #allocation2 [shape = 'bf16[256,192]{1,0:T(8,128)(2,1)}', space=vmem, size = 0x20000, scoped, tag = 'scratch operand']
  #allocation3 [shape = 'f32[16,16,64]{2,1,0:T(8,128)}', space=vmem, size = 0x20000, scoped, tag = 'scratch operand']
  %s0 = inlined_call_operand.vmem [shape: f32[2,16,16,64], index: 0, kind: input, shape index: {}, may-alias: {0,1,2}]
  %s1 = inlined_call_operand.vmem [shape: f32[2,16,16,64], index: 1, kind: input, shape index: {}, may-alias: {0,1,2}]
  %s2 = inlined_call_operand.vmem [shape: f32[2,16,16,64], index: 2, kind: input, shape index: {}, may-alias: {0,1,2}]
  %s3 = inlined_call_operand.vmem [shape: bf16[192,192], index: 3, kind: input, shape index: {}]
  %s4 = inlined_call_operand.hbm [shape: f32[2,16,16,64], index: 4, kind: output, shape index: {}]
  %s5 = sld [smem:[#allocation0]]
  $region49: #{conv_relu_block.1} parent=0
    _
  %s7 = ssub.s32 1, %s5
  %s8 = scalar_select 0, %s7, %s5
  $region1: #{conv_relu_block.1} parent=0
    #allocation4 [shape = 'u8[262144]{0}', space=vmem, size = 0x40000, scoped, tag = 'output window, operand 0']
    #allocation5 [shape = 's32[2]{0}', space=sflag, size = 0x8, scoped, tag = 'scoped memory for conv_relu_block.1']
    %9 = vsyncpa [#allocation5], 0
    %s10 = scalar_lea.sflag [#allocation5], 1
    %11 = vsyncpa %s10, 0
    loop: start=0, step=1, limit=4
    $region2: #{conv_relu_block.1} parent=1 // loop_pre_header
      _
    $region3: #{conv_relu_block.1} parent=1 // loop_header
      %s13 = sphi 0, %s17
      %p14 = scmp.ge.s32.totalorder %s13, 4
      %s20 = sphi 0, %s32
      %s21 = sphi 0, %s28
      %s22 = sphi 0, %s20
      %s23 = sphi 0, %s21
      %s24 = sphi 0, %s22
      %s25 = sphi 0, %s23
      %s37 = sphi 0, %s39
      %s40 = sphi 0, %s37
      %s41 = sphi 0, %s40
      %s57 = sphi 0, %s41
      %s73 = sphi 0, %s75
      %s76 = sphi 0, %s73
      %s77 = sphi 0, %s76
      %s93 = sphi 0, %s77
      %s109 = sphi 0, %s111
      %s112 = sphi 0, %s109
      %s113 = sphi 0, %s112
      %s129 = sphi 0, %s113
      %s133 = sphi 0, %s133
      %s135 = sphi 0, %s133
      %s136 = sphi 0, %s135
      %s150 = sphi 0, %s136
      %s158 = sphi 0, %s160
      %s161 = sphi 0, %s158
      %s162 = sphi 0, %s161
      %s178 = sphi 0, %s162
    $region4: #{conv_relu_block.1} parent=1 // loop_header_branch
      %16 = sbr.rel (%p14) target = $region8
    $region5: #{conv_relu_block.1} parent=1 // loop_body
      %s18 = ssub.s32 %s13, 1
      %s19 = ssub.s32 %s13, 2
      %s26 = sadd.s32 1, %s21
      %p27 = scmp.ge.s32.totalorder %s26, 1
      %s28 = scalar_select %p27, 0, %s26
      %s29 = sadd.s32 1, %s20
      %s30 = scalar_select %p27, %s29, %s20
      %p31 = scmp.ge.s32.totalorder %s30, 2
      %s32 = scalar_select %p31, 0, %s30
      %s33 = ssub.s32 %s20, %s32
      %s34 = ssub.s32 %s21, %s28
      %s35 = sor.u32 %s33, %s34
      %p36 = scmp.eq.s32.totalorder %s35, 0
      %s38 = sadd.s32 %s37, 1
      %s39 = scalar_select %p36, %s37, %s38
      %p42 = pneg %p36
      %p43 = scmp.eq.s32.totalorder %s13, 1
      %p44 = por %p42, %p43
      %p45 = scmp.ne.s32.totalorder %s37, %s40
      %p46 = scmp.eq.s32.totalorder %s13, 0
      %p47 = por %p45, %p46
      %p48 = scmp.ne.s32.totalorder %s37, %s40
      %p49 = scmp.eq.s32.totalorder %s18, 1
      %p50 = por %p48, %p49
      %p51 = scmp.ne.s32.totalorder %s40, %s41
      %p52 = scmp.eq.s32.totalorder %s18, 0
      %p53 = por %p51, %p52
      %p54 = scmp.ne.s32.totalorder %s40, %s41
      %p55 = scmp.eq.s32.totalorder %s19, 1
      %p56 = por %p54, %p55
      %p58 = scmp.ne.s32.totalorder %s41, %s57
      %p59 = scmp.eq.s32.totalorder %s19, 0
      %p60 = por %p58, %p59
      %s61 = smul.u32 %s21, 16
      %s62 = ssub.s32 %s61, 1
      %p63 = scmp.gt.s32.totalorder %s62, 0
      %s64 = scalar_select %p63, %s62, 0
      %s65 = smul.u32 %s28, 16
      %s66 = ssub.s32 %s65, 1
      %p67 = scmp.gt.s32.totalorder %s66, 0
      %s68 = scalar_select %p67, %s66, 0
      %s69 = ssub.s32 %s20, %s32
      %s70 = ssub.s32 %s64, %s68
      %s71 = sor.u32 %s69, %s70
      %p72 = scmp.eq.s32.totalorder %s71, 0
      %s74 = sadd.s32 %s73, 1
      %s75 = scalar_select %p72, %s73, %s74
      %p78 = pneg %p72
      %p79 = scmp.eq.s32.totalorder %s13, 1
      %p80 = por %p78, %p79
      %p81 = scmp.ne.s32.totalorder %s73, %s76
      %p82 = scmp.eq.s32.totalorder %s13, 0
      %p83 = por %p81, %p82
      %p84 = scmp.ne.s32.totalorder %s73, %s76
      %p85 = scmp.eq.s32.totalorder %s18, 1
      %p86 = por %p84, %p85
      %p87 = scmp.ne.s32.totalorder %s76, %s77
      %p88 = scmp.eq.s32.totalorder %s18, 0
      %p89 = por %p87, %p88
      %p90 = scmp.ne.s32.totalorder %s76, %s77
      %p91 = scmp.eq.s32.totalorder %s19, 1
      %p92 = por %p90, %p91
      %p94 = scmp.ne.s32.totalorder %s77, %s93
      %p95 = scmp.eq.s32.totalorder %s19, 0
      %p96 = por %p94, %p95
      %s97 = smul.u32 %s21, 16
      %s98 = sadd.s32 %s97, 16
      %p99 = scmp.lt.s32.totalorder %s98, 15
      %s100 = scalar_select %p99, %s98, 15
      %s101 = smul.u32 %s28, 16
      %s102 = sadd.s32 %s101, 16
      %p103 = scmp.lt.s32.totalorder %s102, 15
      %s104 = scalar_select %p103, %s102, 15
      %s105 = ssub.s32 %s20, %s32
      %s106 = ssub.s32 %s100, %s104
      %s107 = sor.u32 %s105, %s106
      %p108 = scmp.eq.s32.totalorder %s107, 0
      %s110 = sadd.s32 %s109, 1
      %s111 = scalar_select %p108, %s109, %s110
      %p114 = pneg %p108
      %p115 = scmp.eq.s32.totalorder %s13, 1
      %p116 = por %p114, %p115
      %p117 = scmp.ne.s32.totalorder %s109, %s112
      %p118 = scmp.eq.s32.totalorder %s13, 0
      %p119 = por %p117, %p118
      %p120 = scmp.ne.s32.totalorder %s109, %s112
      %p121 = scmp.eq.s32.totalorder %s18, 1
      %p122 = por %p120, %p121
      %p123 = scmp.ne.s32.totalorder %s112, %s113
      %p124 = scmp.eq.s32.totalorder %s18, 0
      %p125 = por %p123, %p124
      %p126 = scmp.ne.s32.totalorder %s112, %s113
      %p127 = scmp.eq.s32.totalorder %s19, 1
      %p128 = por %p126, %p127
      %p130 = scmp.ne.s32.totalorder %s113, %s129
      %p131 = scmp.eq.s32.totalorder %s19, 0
      %p132 = por %p130, %p131
      %s134 = sadd.s32 %s133, 1
      %p137 = scmp.eq.s32.totalorder %s13, 1
      %p138 = scmp.ne.s32.totalorder %s133, %s135
      %p139 = scmp.eq.s32.totalorder %s13, 0
      %p140 = por %p138, %p139
      %p141 = scmp.ne.s32.totalorder %s133, %s135
      %p142 = scmp.eq.s32.totalorder %s18, 1
      %p143 = por %p141, %p142
      %p144 = scmp.ne.s32.totalorder %s135, %s136
      %p145 = scmp.eq.s32.totalorder %s18, 0
      %p146 = por %p144, %p145
      %p147 = scmp.ne.s32.totalorder %s135, %s136
      %p148 = scmp.eq.s32.totalorder %s19, 1
      %p149 = por %p147, %p148
      %p151 = scmp.ne.s32.totalorder %s136, %s150
      %p152 = scmp.eq.s32.totalorder %s19, 0
      %p153 = por %p151, %p152
      %s154 = ssub.s32 %s20, %s32
      %s155 = ssub.s32 %s21, %s28
      %s156 = sor.u32 %s154, %s155
      %p157 = scmp.eq.s32.totalorder %s156, 0
      %s159 = sadd.s32 %s158, 1
      %s160 = scalar_select %p157, %s158, %s159
      %p163 = pneg %p157
      %p164 = scmp.eq.s32.totalorder %s13, 1
      %p165 = por %p163, %p164
      %p166 = scmp.ne.s32.totalorder %s158, %s161
      %p167 = scmp.eq.s32.totalorder %s13, 0
      %p168 = por %p166, %p167
      %p169 = scmp.ne.s32.totalorder %s158, %s161
      %p170 = scmp.eq.s32.totalorder %s18, 1
      %p171 = por %p169, %p170
      %p172 = scmp.ne.s32.totalorder %s161, %s162
      %p173 = scmp.eq.s32.totalorder %s18, 0
      %p174 = por %p172, %p173
      %p175 = scmp.ne.s32.totalorder %s161, %s162
      %p176 = scmp.eq.s32.totalorder %s19, 1
      %p177 = por %p175, %p176
      %p179 = scmp.ne.s32.totalorder %s162, %s178
      %p180 = scmp.eq.s32.totalorder %s19, 0
      %p181 = por %p179, %p180
      %p182 = scmp.le.s32.totalorder 1, %s13
      %p183 = scmp.lt.s32.totalorder %s13, 3
      %p184 = pnand %p182, %p183
      %p185 = pneg %p184
      // Predicated region
      $region9: #{conv_relu_block.1} parent=5 // pred_check
        _
      $region10: #{conv_relu_block.1} parent=5 // pred_check_branch
        %187 = sbr.rel (%p184) target = $region12
      $region11: #{conv_relu_block.1} parent=5 // pred_region
        %s188 = ssub.s32 %s13, 1
        // Predicated region
        $region13: #{conv_relu_block.1} parent=11 // pred_check
          %p189 = pneg %p146
        $region14: #{conv_relu_block.1} parent=11 // pred_check_branch
          %191 = sbr.rel (%p189) target = $region16
        $region15: #{conv_relu_block.1} parent=11 // pred_region
          _
        $region16: #{conv_relu_block.1} parent=11 // pred_fallthru
          _
      $region12: #{conv_relu_block.1} parent=5 // pred_fallthru
        _
      %p192 = scmp.lt.s32.totalorder %s13, 2
      // Predicated region
      $region17: #{conv_relu_block.1} parent=5 // pred_check
        %p193 = pneg %p192
      $region18: #{conv_relu_block.1} parent=5 // pred_check_branch
        %195 = sbr.rel (%p193) target = $region20
      $region19: #{conv_relu_block.1} parent=5 // pred_region
        // Predicated region
        $region21: #{conv_relu_block.1} parent=19 // pred_check
          %p196 = pneg %p47
        $region22: #{conv_relu_block.1} parent=19 // pred_check_branch
          %198 = sbr.rel (%p196) target = $region24
        $region23: #{conv_relu_block.1} parent=19 // pred_region
          %s199 = smul.u32 16, %s21
          %p200 = scmp.lt.s32.totalorder %s20, 1
          %s201 = scalar_select %p200, %s20, 1
          %p202 = scmp.lt.s32.totalorder %s199, 15
          %s203 = scalar_select %p202, %s199, 15
          %s204 = smul.addr %s203, 2
          %s205 = smul.addr %s201, 32
          %s206 = sadd.s32 %s204, %s205
          %s207 = smul.addr %s206, 8
          %s208 = scalar_lea.vmem %s0, %s207
          %s209 = smul.u32 16, %s21
        $region24: #{conv_relu_block.1} parent=19 // pred_fallthru
          _
        // Predicated region
        $region25: #{conv_relu_block.1} parent=19 // pred_check
          %p210 = pneg %p83
        $region26: #{conv_relu_block.1} parent=19 // pred_check_branch
          %212 = sbr.rel (%p210) target = $region28
        $region27: #{conv_relu_block.1} parent=19 // pred_region
          %s213 = smul.u32 %s21, 16
          %s214 = ssub.s32 %s213, 1
          %p215 = scmp.gt.s32.totalorder %s214, 0
          %s216 = scalar_select %p215, %s214, 0
          %p217 = scmp.lt.s32.totalorder %s20, 1
          %s218 = scalar_select %p217, %s20, 1
          %p219 = scmp.lt.s32.totalorder %s216, 15
          %s220 = scalar_select %p219, %s216, 15
          %s221 = smul.addr %s220, 2
          %s222 = smul.addr %s218, 32
          %s223 = sadd.s32 %s221, %s222
          %s224 = smul.addr %s223, 8
          %s225 = scalar_lea.vmem %s1, %s224
          %s226 = smul.u32 %s21, 16
          %s227 = ssub.s32 %s226, 1
          %p228 = scmp.gt.s32.totalorder %s227, 0
          %s229 = scalar_select %p228, %s227, 0
        $region28: #{conv_relu_block.1} parent=19 // pred_fallthru
          _
        // Predicated region
        $region29: #{conv_relu_block.1} parent=19 // pred_check
          %p230 = pneg %p119
        $region30: #{conv_relu_block.1} parent=19 // pred_check_branch
          %232 = sbr.rel (%p230) target = $region32
        $region31: #{conv_relu_block.1} parent=19 // pred_region
          %s233 = smul.u32 %s21, 16
          %s234 = sadd.s32 %s233, 16
          %p235 = scmp.lt.s32.totalorder %s234, 15
          %s236 = scalar_select %p235, %s234, 15
          %p237 = scmp.lt.s32.totalorder %s20, 1
          %s238 = scalar_select %p237, %s20, 1
          %p239 = scmp.lt.s32.totalorder %s236, 15
          %s240 = scalar_select %p239, %s236, 15
          %s241 = smul.addr %s240, 2
          %s242 = smul.addr %s238, 32
          %s243 = sadd.s32 %s241, %s242
          %s244 = smul.addr %s243, 8
          %s245 = scalar_lea.vmem %s2, %s244
          %s246 = smul.u32 %s21, 16
          %s247 = sadd.s32 %s246, 16
          %p248 = scmp.lt.s32.totalorder %s247, 15
          %s249 = scalar_select %p248, %s247, 15
        $region32: #{conv_relu_block.1} parent=19 // pred_fallthru
          _
      $region20: #{conv_relu_block.1} parent=5 // pred_fallthru
        _
      %p250 = scmp.le.s32.totalorder 1, %s13
      %p251 = scmp.lt.s32.totalorder %s13, 3
      %p252 = pnand %p250, %p251
      %p253 = pneg %p252
      // Predicated region
      $region33: #{conv_relu_block.1} parent=5 // pred_check
        _
      $region34: #{conv_relu_block.1} parent=5 // pred_check_branch
        %255 = sbr.rel (%p252) target = $region36
      $region35: #{conv_relu_block.1} parent=5 // pred_region
        %s256 = ssub.s32 %s13, 1
        %s257 = smul.u32 16, %s23
        %p258 = scmp.lt.s32.totalorder %s22, 1
        %s259 = scalar_select %p258, %s22, 1
        %p260 = scmp.lt.s32.totalorder %s257, 15
        %s261 = scalar_select %p260, %s257, 15
        %s262 = smul.addr %s261, 2
        %s263 = smul.addr %s259, 32
        %s264 = sadd.s32 %s262, %s263
        %s265 = smul.addr %s264, 8
        %s266 = scalar_lea.vmem %s0, %s265
        %p267 = pneg %p53
        %p268 = pneg %p50
        %s269 = smul.u32 %s23, 16
        %s270 = ssub.s32 %s269, 1
        %p271 = scmp.gt.s32.totalorder %s270, 0
        %s272 = scalar_select %p271, %s270, 0
        %p273 = scmp.lt.s32.totalorder %s22, 1
        %s274 = scalar_select %p273, %s22, 1
        %p275 = scmp.lt.s32.totalorder %s272, 15
        %s276 = scalar_select %p275, %s272, 15
        %s277 = smul.addr %s276, 2
        %s278 = smul.addr %s274, 32
        %s279 = sadd.s32 %s277, %s278
        %s280 = smul.addr %s279, 8
        %s281 = scalar_lea.vmem %s1, %s280
        %p282 = pneg %p89
        %p283 = pneg %p86
        %s284 = smul.u32 %s23, 16
        %s285 = sadd.s32 %s284, 16
        %p286 = scmp.lt.s32.totalorder %s285, 15
        %s287 = scalar_select %p286, %s285, 15
        %p288 = scmp.lt.s32.totalorder %s22, 1
        %s289 = scalar_select %p288, %s22, 1
        %p290 = scmp.lt.s32.totalorder %s287, 15
        %s291 = scalar_select %p290, %s287, 15
        %s292 = smul.addr %s291, 2
        %s293 = smul.addr %s289, 32
        %s294 = sadd.s32 %s292, %s293
        %s295 = smul.addr %s294, 8
        %s296 = scalar_lea.vmem %s2, %s295
        %p297 = pneg %p125
        %p298 = pneg %p122
        %p299 = pneg %p146
        %p300 = pneg %p143
        %p301 = pneg %p174
        %p302 = pneg %p171
        %s303 = sand.u32 %s161, 1
        %s304 = scalar_lea.sflag [#allocation5], %s303
        %s305 = sand.u32 %s161, 1
        %s306 = smul.addr %s305, 256
        %s307 = scalar_lea.vmem [#allocation4], %s306
        %s308 = smul.u32 16, %s23
        %p309 = scmp.lt.s32.totalorder %s22, 1
        %s310 = scalar_select %p309, %s22, 1
        %p311 = scmp.lt.s32.totalorder %s308, 15
        %s312 = scalar_select %p311, %s308, 15
        %s313 = smul.addr %s312, 2
        %s314 = smul.addr %s310, 32
        %s315 = sadd.s32 %s313, %s314
        %s316 = smul.addr %s315, 8
        %s317 = scalar_lea.vmem %s0, %s316
        %s318 = smul.u32 16, %s23
        %s319 = smul.u32 %s23, 16
        %s320 = ssub.s32 %s319, 1
        %p321 = scmp.gt.s32.totalorder %s320, 0
        %s322 = scalar_select %p321, %s320, 0
        %p323 = scmp.lt.s32.totalorder %s22, 1
        %s324 = scalar_select %p323, %s22, 1
        %p325 = scmp.lt.s32.totalorder %s322, 15
        %s326 = scalar_select %p325, %s322, 15
        %s327 = smul.addr %s326, 2
        %s328 = smul.addr %s324, 32
        %s329 = sadd.s32 %s327, %s328
        %s330 = smul.addr %s329, 8
        %s331 = scalar_lea.vmem %s1, %s330
        %s332 = smul.u32 %s23, 16
        %s333 = ssub.s32 %s332, 1
        %p334 = scmp.gt.s32.totalorder %s333, 0
        %s335 = scalar_select %p334, %s333, 0
        %s336 = smul.u32 %s23, 16
        %s337 = sadd.s32 %s336, 16
        %p338 = scmp.lt.s32.totalorder %s337, 15
        %s339 = scalar_select %p338, %s337, 15
        %p340 = scmp.lt.s32.totalorder %s22, 1
        %s341 = scalar_select %p340, %s22, 1
        %p342 = scmp.lt.s32.totalorder %s339, 15
        %s343 = scalar_select %p342, %s339, 15
        %s344 = smul.addr %s343, 2
        %s345 = smul.addr %s341, 32
        %s346 = sadd.s32 %s344, %s345
        %s347 = smul.addr %s346, 8
        %s348 = scalar_lea.vmem %s2, %s347
        %s349 = smul.u32 %s23, 16
        %s350 = sadd.s32 %s349, 16
        %p351 = scmp.lt.s32.totalorder %s350, 15
        %s352 = scalar_select %p351, %s350, 15
        %s353 = smul.u32 16, %s23
        %v355 = vld [vmem:[%s317] sm:$0xff]
        %v356 = vld [vmem:[%s317 + $0x8] sm:$0xff]
        %v357 = vld [vmem:[%s317 + $0x10] sm:$0xff]
        %v358 = vld [vmem:[%s317 + $0x18] sm:$0xff]
        %v359 = vld [vmem:[%s317 + $0x20] sm:$0xff]
        %v360 = vld [vmem:[%s317 + $0x28] sm:$0xff]
        %v361 = vld [vmem:[%s317 + $0x30] sm:$0xff]
        %v362 = vld [vmem:[%s317 + $0x38] sm:$0xff]
        %v363 = vld [vmem:[%s317 + $0x40] sm:$0xff]
        %v364 = vld [vmem:[%s317 + $0x48] sm:$0xff]
        %v365 = vld [vmem:[%s317 + $0x50] sm:$0xff]
        %v366 = vld [vmem:[%s317 + $0x58] sm:$0xff]
        %v367 = vld [vmem:[%s317 + $0x60] sm:$0xff]
        %v368 = vld [vmem:[%s317 + $0x68] sm:$0xff]
        %v369 = vld [vmem:[%s317 + $0x70] sm:$0xff]
        %v370 = vld [vmem:[%s317 + $0x78] sm:$0xff]
        %v371 = vld [vmem:[%s317 + $0x80] sm:$0xff]
        %v372 = vld [vmem:[%s317 + $0x88] sm:$0xff]
        %v373 = vld [vmem:[%s317 + $0x90] sm:$0xff]
        %v374 = vld [vmem:[%s317 + $0x98] sm:$0xff]
        %v375 = vld [vmem:[%s317 + $0xa0] sm:$0xff]
        %v376 = vld [vmem:[%s317 + $0xa8] sm:$0xff]
        %v377 = vld [vmem:[%s317 + $0xb0] sm:$0xff]
        %v378 = vld [vmem:[%s317 + $0xb8] sm:$0xff]
        %v379 = vld [vmem:[%s317 + $0xc0] sm:$0xff]
        %v380 = vld [vmem:[%s317 + $0xc8] sm:$0xff]
        %v381 = vld [vmem:[%s317 + $0xd0] sm:$0xff]
        %v382 = vld [vmem:[%s317 + $0xd8] sm:$0xff]
        %v383 = vld [vmem:[%s317 + $0xe0] sm:$0xff]
        %v384 = vld [vmem:[%s317 + $0xe8] sm:$0xff]
        %v385 = vld [vmem:[%s317 + $0xf0] sm:$0xff]
        %v386 = vld [vmem:[%s317 + $0xf8] sm:$0xff]
        %v387 = vpack.c.bf16 %v356, %v355
        %v388 = vpack.c.bf16 %v358, %v357
        %v389 = vpack.c.bf16 %v360, %v359
        %v390 = vpack.c.bf16 %v362, %v361
        %v391 = vpack.c.bf16 %v364, %v363
        %v392 = vpack.c.bf16 %v366, %v365
        %v393 = vpack.c.bf16 %v368, %v367
        %v394 = vpack.c.bf16 %v370, %v369
        %v395 = vpack.c.bf16 %v372, %v371
        %v396 = vpack.c.bf16 %v374, %v373
        %v397 = vpack.c.bf16 %v376, %v375
        %v398 = vpack.c.bf16 %v378, %v377
        %v399 = vpack.c.bf16 %v380, %v379
        %v400 = vpack.c.bf16 %v382, %v381
        %v401 = vpack.c.bf16 %v384, %v383
        %v402 = vpack.c.bf16 %v386, %v385
        %v403 = vld [vmem:[%s331] sm:$0xff]
        %v404 = vld [vmem:[%s331 + $0x8] sm:$0xff]
        %v405 = vld [vmem:[%s348] sm:$0xff]
        %v406 = vld [vmem:[%s348 + $0x8] sm:$0xff]
        %p407 = scmp.eq.s32.totalorder %s23, 0
        %s408 = scalar_select %p407, 0.0, 1.0
        %v409 = vstv %s408
        %v410 = vmul.f32 %v403, %v409
        %v411 = vmul.f32 %v404, %v409
        %v412 = vmul.f32 %v405, %v409
        %v413 = vmul.f32 %v406, %v409
        %v414 = vpack.c.bf16 %v411, %v410
        %v415 = vpack.c.bf16 %v413, %v412
        %v432 = vunpack.c.l.b16 %v387
        %v433 = vunpack.c.h.b16 %v387
        %v434 = vunpack.c.l.b16 %v388
        %v435 = vunpack.c.h.b16 %v388
        %v436 = vunpack.c.l.b16 %v389
        %v437 = vunpack.c.h.b16 %v389
        %v438 = vunpack.c.l.b16 %v390
        %v439 = vunpack.c.h.b16 %v390
        %v440 = vunpack.c.l.b16 %v391
        %v441 = vunpack.c.h.b16 %v391
        %v442 = vunpack.c.l.b16 %v392
        %v443 = vunpack.c.h.b16 %v392
        %v444 = vunpack.c.l.b16 %v393
        %v445 = vunpack.c.h.b16 %v393
        %v446 = vunpack.c.l.b16 %v394
        %v447 = vunpack.c.h.b16 %v394
        %v448 = vunpack.c.l.b16 %v395
        %v449 = vunpack.c.h.b16 %v395
        %v450 = vunpack.c.l.b16 %v396
        %v451 = vunpack.c.h.b16 %v396
        %v452 = vunpack.c.l.b16 %v397
        %v453 = vunpack.c.h.b16 %v397
        %v454 = vunpack.c.l.b16 %v398
        %v455 = vunpack.c.h.b16 %v398
        %v456 = vunpack.c.l.b16 %v399
        %v457 = vunpack.c.h.b16 %v399
        %v458 = vunpack.c.l.b16 %v400
        %v459 = vunpack.c.h.b16 %v400
        %v460 = vunpack.c.l.b16 %v401
        %v461 = vunpack.c.h.b16 %v401
        %v462 = vunpack.c.l.b16 %v402
        %v463 = vunpack.c.h.b16 %v402
        %v464 = vpack.c.b16 %v432, %v432
        %v465 = vpack.c.b16 %v433, %v433
        %v466 = vpack.c.b16 %v434, %v434
        %v467 = vpack.c.b16 %v435, %v435
        %v468 = vpack.c.b16 %v436, %v436
        %v469 = vpack.c.b16 %v437, %v437
        %v470 = vpack.c.b16 %v438, %v438
        %v471 = vpack.c.b16 %v439, %v439
        %v472 = vpack.c.b16 %v440, %v440
        %v473 = vpack.c.b16 %v441, %v441
        %v474 = vpack.c.b16 %v442, %v442
        %v475 = vpack.c.b16 %v443, %v443
        %v476 = vpack.c.b16 %v444, %v444
        %v477 = vpack.c.b16 %v445, %v445
        %v478 = vpack.c.b16 %v446, %v446
        %v479 = vpack.c.b16 %v447, %v447
        %v480 = vpack.c.b16 %v448, %v448
        %v481 = vpack.c.b16 %v449, %v449
        %v482 = vpack.c.b16 %v450, %v450
        %v483 = vpack.c.b16 %v451, %v451
        %v484 = vpack.c.b16 %v452, %v452
        %v485 = vpack.c.b16 %v453, %v453
        %v486 = vpack.c.b16 %v454, %v454
        %v487 = vpack.c.b16 %v455, %v455
        %v488 = vpack.c.b16 %v456, %v456
        %v489 = vpack.c.b16 %v457, %v457
        %v490 = vpack.c.b16 %v458, %v458
        %v491 = vpack.c.b16 %v459, %v459
        %v492 = vpack.c.b16 %v460, %v460
        %v493 = vpack.c.b16 %v461, %v461
        %v494 = vpack.c.b16 %v462, %v462
        %v495 = vpack.c.b16 %v463, %v463
        %496 = vrot.lane.b32.xlu0 %v464, 64
        %v497 = vpop.permute.xlu0 %496
        %498 = vrot.lane.b32.xlu0 %v465, 64
        %v499 = vpop.permute.xlu0 %498
        %500 = vrot.lane.b32.xlu0 %v466, 64
        %v501 = vpop.permute.xlu0 %500
        %502 = vrot.lane.b32.xlu0 %v467, 64
        %v503 = vpop.permute.xlu0 %502
        %504 = vrot.lane.b32.xlu0 %v468, 64
        %v505 = vpop.permute.xlu0 %504
        %506 = vrot.lane.b32.xlu0 %v469, 64
        %v507 = vpop.permute.xlu0 %506
        %508 = vrot.lane.b32.xlu0 %v470, 64
        %v509 = vpop.permute.xlu0 %508
        %510 = vrot.lane.b32.xlu0 %v471, 64
        %v511 = vpop.permute.xlu0 %510
        %512 = vrot.lane.b32.xlu0 %v472, 64
        %v513 = vpop.permute.xlu0 %512
        %514 = vrot.lane.b32.xlu0 %v473, 64
        %v515 = vpop.permute.xlu0 %514
        %516 = vrot.lane.b32.xlu0 %v474, 64
        %v517 = vpop.permute.xlu0 %516
        %518 = vrot.lane.b32.xlu0 %v475, 64
        %v519 = vpop.permute.xlu0 %518
        %520 = vrot.lane.b32.xlu0 %v476, 64
        %v521 = vpop.permute.xlu0 %520
        %522 = vrot.lane.b32.xlu0 %v477, 64
        %v523 = vpop.permute.xlu0 %522
        %524 = vrot.lane.b32.xlu0 %v478, 64
        %v525 = vpop.permute.xlu0 %524
        %526 = vrot.lane.b32.xlu0 %v479, 64
        %v527 = vpop.permute.xlu0 %526
        %528 = vrot.lane.b32.xlu0 %v480, 64
        %v529 = vpop.permute.xlu0 %528
        %530 = vrot.lane.b32.xlu0 %v481, 64
        %v531 = vpop.permute.xlu0 %530
        %532 = vrot.lane.b32.xlu0 %v482, 64
        %v533 = vpop.permute.xlu0 %532
        %534 = vrot.lane.b32.xlu0 %v483, 64
        %v535 = vpop.permute.xlu0 %534
        %536 = vrot.lane.b32.xlu0 %v484, 64
        %v537 = vpop.permute.xlu0 %536
        %538 = vrot.lane.b32.xlu0 %v485, 64
        %v539 = vpop.permute.xlu0 %538
        %540 = vrot.lane.b32.xlu0 %v486, 64
        %v541 = vpop.permute.xlu0 %540
        %542 = vrot.lane.b32.xlu0 %v487, 64
        %v543 = vpop.permute.xlu0 %542
        %544 = vrot.lane.b32.xlu0 %v488, 64
        %v545 = vpop.permute.xlu0 %544
        %546 = vrot.lane.b32.xlu0 %v489, 64
        %v547 = vpop.permute.xlu0 %546
        %548 = vrot.lane.b32.xlu0 %v490, 64
        %v549 = vpop.permute.xlu0 %548
        %550 = vrot.lane.b32.xlu0 %v491, 64
        %v551 = vpop.permute.xlu0 %550
        %552 = vrot.lane.b32.xlu0 %v492, 64
        %v553 = vpop.permute.xlu0 %552
        %554 = vrot.lane.b32.xlu0 %v493, 64
        %v555 = vpop.permute.xlu0 %554
        %556 = vrot.lane.b32.xlu0 %v494, 64
        %v557 = vpop.permute.xlu0 %556
        %558 = vrot.lane.b32.xlu0 %v495, 64
        %v559 = vpop.permute.xlu0 %558
        %vm592 = vcmask 1043968
        %593 = vst.msk [vmem:[#allocation2] sm:$0xf] %vm592, %v497
        %594 = vst.msk [vmem:[#allocation2 + $0x8] sm:$0xf] %vm592, %v499
        %595 = vst.msk [vmem:[#allocation2 + $0x10] sm:$0xf] %vm592, %v501
        %596 = vst.msk [vmem:[#allocation2 + $0x18] sm:$0xf] %vm592, %v503
        %597 = vst.msk [vmem:[#allocation2 + $0x20] sm:$0xf] %vm592, %v505
        %598 = vst.msk [vmem:[#allocation2 + $0x28] sm:$0xf] %vm592, %v507
        %599 = vst.msk [vmem:[#allocation2 + $0x30] sm:$0xf] %vm592, %v509
        %600 = vst.msk [vmem:[#allocation2 + $0x38] sm:$0xf] %vm592, %v511
        %601 = vst.msk [vmem:[#allocation2 + $0x40] sm:$0xf] %vm592, %v513
        %602 = vst.msk [vmem:[#allocation2 + $0x48] sm:$0xf] %vm592, %v515
        %603 = vst.msk [vmem:[#allocation2 + $0x50] sm:$0xf] %vm592, %v517
        %604 = vst.msk [vmem:[#allocation2 + $0x58] sm:$0xf] %vm592, %v519
        %605 = vst.msk [vmem:[#allocation2 + $0x60] sm:$0xf] %vm592, %v521
        %606 = vst.msk [vmem:[#allocation2 + $0x68] sm:$0xf] %vm592, %v523
        %607 = vst.msk [vmem:[#allocation2 + $0x70] sm:$0xf] %vm592, %v525
        %608 = vst.msk [vmem:[#allocation2 + $0x78] sm:$0xf] %vm592, %v527
        %609 = vst.msk [vmem:[#allocation2 + $0x80] sm:$0xf] %vm592, %v529
        %610 = vst.msk [vmem:[#allocation2 + $0x88] sm:$0xf] %vm592, %v531
        %611 = vst.msk [vmem:[#allocation2 + $0x90] sm:$0xf] %vm592, %v533
        %612 = vst.msk [vmem:[#allocation2 + $0x98] sm:$0xf] %vm592, %v535
        %613 = vst.msk [vmem:[#allocation2 + $0xa0] sm:$0xf] %vm592, %v537
        %614 = vst.msk [vmem:[#allocation2 + $0xa8] sm:$0xf] %vm592, %v539
        %615 = vst.msk [vmem:[#allocation2 + $0xb0] sm:$0xf] %vm592, %v541
        %616 = vst.msk [vmem:[#allocation2 + $0xb8] sm:$0xf] %vm592, %v543
        %617 = vst.msk [vmem:[#allocation2 + $0xc0] sm:$0xf] %vm592, %v545
        %618 = vst.msk [vmem:[#allocation2 + $0xc8] sm:$0xf] %vm592, %v547
        %619 = vst.msk [vmem:[#allocation2 + $0xd0] sm:$0xf] %vm592, %v549
        %620 = vst.msk [vmem:[#allocation2 + $0xd8] sm:$0xf] %vm592, %v551
        %621 = vst.msk [vmem:[#allocation2 + $0xe0] sm:$0xf] %vm592, %v553
        %622 = vst.msk [vmem:[#allocation2 + $0xe8] sm:$0xf] %vm592, %v555
        %623 = vst.msk [vmem:[#allocation2 + $0xf0] sm:$0xf] %vm592, %v557
        %624 = vst.msk [vmem:[#allocation2 + $0xf8] sm:$0xf] %vm592, %v559
        %v626 = vunpack.c.l.b16 %v414
        %v627 = vunpack.c.h.b16 %v414
        %v628 = vpack.c.b16 %v626, %v626
        %v629 = vpack.c.b16 %v627, %v627
        %vm632 = vcmask 519168
        %633 = vst.msk [vmem:[#allocation2] sm:$0xf] %vm632, %v628
        %634 = vst.msk [vmem:[#allocation2 + $0x8] sm:$0xf] %vm632, %v629
        %665 = vst.msk [vmem:[#allocation2 + $0x10] sm:$0xf] %vm632, %v464
        %666 = vst.msk [vmem:[#allocation2 + $0x18] sm:$0xf] %vm632, %v465
        %667 = vst.msk [vmem:[#allocation2 + $0x20] sm:$0xf] %vm632, %v466
        %668 = vst.msk [vmem:[#allocation2 + $0x28] sm:$0xf] %vm632, %v467
        %669 = vst.msk [vmem:[#allocation2 + $0x30] sm:$0xf] %vm632, %v468
        %670 = vst.msk [vmem:[#allocation2 + $0x38] sm:$0xf] %vm632, %v469
        %671 = vst.msk [vmem:[#allocation2 + $0x40] sm:$0xf] %vm632, %v470
        %672 = vst.msk [vmem:[#allocation2 + $0x48] sm:$0xf] %vm632, %v471
        %673 = vst.msk [vmem:[#allocation2 + $0x50] sm:$0xf] %vm632, %v472
        %674 = vst.msk [vmem:[#allocation2 + $0x58] sm:$0xf] %vm632, %v473
        %675 = vst.msk [vmem:[#allocation2 + $0x60] sm:$0xf] %vm632, %v474
        %676 = vst.msk [vmem:[#allocation2 + $0x68] sm:$0xf] %vm632, %v475
        %677 = vst.msk [vmem:[#allocation2 + $0x70] sm:$0xf] %vm632, %v476
        %678 = vst.msk [vmem:[#allocation2 + $0x78] sm:$0xf] %vm632, %v477
        %679 = vst.msk [vmem:[#allocation2 + $0x80] sm:$0xf] %vm632, %v478
        %680 = vst.msk [vmem:[#allocation2 + $0x88] sm:$0xf] %vm632, %v479
        %681 = vst.msk [vmem:[#allocation2 + $0x90] sm:$0xf] %vm632, %v480
        %682 = vst.msk [vmem:[#allocation2 + $0x98] sm:$0xf] %vm632, %v481
        %683 = vst.msk [vmem:[#allocation2 + $0xa0] sm:$0xf] %vm632, %v482
        %684 = vst.msk [vmem:[#allocation2 + $0xa8] sm:$0xf] %vm632, %v483
        %685 = vst.msk [vmem:[#allocation2 + $0xb0] sm:$0xf] %vm632, %v484
        %686 = vst.msk [vmem:[#allocation2 + $0xb8] sm:$0xf] %vm632, %v485
        %687 = vst.msk [vmem:[#allocation2 + $0xc0] sm:$0xf] %vm632, %v486
        %688 = vst.msk [vmem:[#allocation2 + $0xc8] sm:$0xf] %vm632, %v487
        %689 = vst.msk [vmem:[#allocation2 + $0xd0] sm:$0xf] %vm632, %v488
        %690 = vst.msk [vmem:[#allocation2 + $0xd8] sm:$0xf] %vm632, %v489
        %691 = vst.msk [vmem:[#allocation2 + $0xe0] sm:$0xf] %vm632, %v490
        %692 = vst.msk [vmem:[#allocation2 + $0xe8] sm:$0xf] %vm632, %v491
        %693 = vst.msk [vmem:[#allocation2 + $0xf0] sm:$0xf] %vm632, %v492
        %694 = vst.msk [vmem:[#allocation2 + $0xf8] sm:$0xf] %vm632, %v493
        %697 = vst.msk [vmem:[#allocation2 + $0x4] sm:$0xf] %vm632, %v466
        %698 = vst.msk [vmem:[#allocation2 + $0xc] sm:$0xf] %vm632, %v467
        %699 = vst.msk [vmem:[#allocation2 + $0x14] sm:$0xf] %vm632, %v468
        %700 = vst.msk [vmem:[#allocation2 + $0x1c] sm:$0xf] %vm632, %v469
        %701 = vst.msk [vmem:[#allocation2 + $0x24] sm:$0xf] %vm632, %v470
        %702 = vst.msk [vmem:[#allocation2 + $0x2c] sm:$0xf] %vm632, %v471
        %703 = vst.msk [vmem:[#allocation2 + $0x34] sm:$0xf] %vm632, %v472
        %704 = vst.msk [vmem:[#allocation2 + $0x3c] sm:$0xf] %vm632, %v473
        %705 = vst.msk [vmem:[#allocation2 + $0x44] sm:$0xf] %vm632, %v474
        %706 = vst.msk [vmem:[#allocation2 + $0x4c] sm:$0xf] %vm632, %v475
        %707 = vst.msk [vmem:[#allocation2 + $0x54] sm:$0xf] %vm632, %v476
        %708 = vst.msk [vmem:[#allocation2 + $0x5c] sm:$0xf] %vm632, %v477
        %709 = vst.msk [vmem:[#allocation2 + $0x64] sm:$0xf] %vm632, %v478
        %710 = vst.msk [vmem:[#allocation2 + $0x6c] sm:$0xf] %vm632, %v479
        %711 = vst.msk [vmem:[#allocation2 + $0x74] sm:$0xf] %vm632, %v480
        %712 = vst.msk [vmem:[#allocation2 + $0x7c] sm:$0xf] %vm632, %v481
        %713 = vst.msk [vmem:[#allocation2 + $0x84] sm:$0xf] %vm632, %v482
        %714 = vst.msk [vmem:[#allocation2 + $0x8c] sm:$0xf] %vm632, %v483
        %715 = vst.msk [vmem:[#allocation2 + $0x94] sm:$0xf] %vm632, %v484
        %716 = vst.msk [vmem:[#allocation2 + $0x9c] sm:$0xf] %vm632, %v485
        %717 = vst.msk [vmem:[#allocation2 + $0xa4] sm:$0xf] %vm632, %v486
        %718 = vst.msk [vmem:[#allocation2 + $0xac] sm:$0xf] %vm632, %v487
        %719 = vst.msk [vmem:[#allocation2 + $0xb4] sm:$0xf] %vm632, %v488
        %720 = vst.msk [vmem:[#allocation2 + $0xbc] sm:$0xf] %vm632, %v489
        %721 = vst.msk [vmem:[#allocation2 + $0xc4] sm:$0xf] %vm632, %v490
        %722 = vst.msk [vmem:[#allocation2 + $0xcc] sm:$0xf] %vm632, %v491
        %723 = vst.msk [vmem:[#allocation2 + $0xd4] sm:$0xf] %vm632, %v492
        %724 = vst.msk [vmem:[#allocation2 + $0xdc] sm:$0xf] %vm632, %v493
        %725 = vst.msk [vmem:[#allocation2 + $0xe4] sm:$0xf] %vm632, %v494
        %726 = vst.msk [vmem:[#allocation2 + $0xec] sm:$0xf] %vm632, %v495
        %v728 = vunpack.c.l.b16 %v415
        %v729 = vunpack.c.h.b16 %v415
        %v730 = vpack.c.b16 %v728, %v728
        %v731 = vpack.c.b16 %v729, %v729
        %734 = vst.msk [vmem:[#allocation2 + $0xf4] sm:$0xf] %vm632, %v730
        %735 = vst.msk [vmem:[#allocation2 + $0xfc] sm:$0xf] %vm632, %v731
        %v736 = vld [vmem:[#allocation2] sm:$0xff]
        %v737 = vld [vmem:[#allocation2 + $0x8] sm:$0xff]
        %v738 = vld [vmem:[#allocation2 + $0x10] sm:$0xff]
        %v739 = vld [vmem:[#allocation2 + $0x18] sm:$0xff]
        %v740 = vld [vmem:[#allocation2 + $0x20] sm:$0xff]
        %v741 = vld [vmem:[#allocation2 + $0x28] sm:$0xff]
        %v742 = vld [vmem:[#allocation2 + $0x30] sm:$0xff]
        %v743 = vld [vmem:[#allocation2 + $0x38] sm:$0xff]
        %v744 = vld [vmem:[#allocation2 + $0x40] sm:$0xff]
        %v745 = vld [vmem:[#allocation2 + $0x48] sm:$0xff]
        %v746 = vld [vmem:[#allocation2 + $0x50] sm:$0xff]
        %v747 = vld [vmem:[#allocation2 + $0x58] sm:$0xff]
        %v748 = vld [vmem:[#allocation2 + $0x60] sm:$0xff]
        %v749 = vld [vmem:[#allocation2 + $0x68] sm:$0xff]
        %v750 = vld [vmem:[#allocation2 + $0x70] sm:$0xff]
        %v751 = vld [vmem:[#allocation2 + $0x78] sm:$0xff]
        %v752 = vld [vmem:[#allocation2 + $0x80] sm:$0xff]
        %v753 = vld [vmem:[#allocation2 + $0x88] sm:$0xff]
        %v754 = vld [vmem:[#allocation2 + $0x90] sm:$0xff]
        %v755 = vld [vmem:[#allocation2 + $0x98] sm:$0xff]
        %v756 = vld [vmem:[#allocation2 + $0xa0] sm:$0xff]
        %v757 = vld [vmem:[#allocation2 + $0xa8] sm:$0xff]
        %v758 = vld [vmem:[#allocation2 + $0xb0] sm:$0xff]
        %v759 = vld [vmem:[#allocation2 + $0xb8] sm:$0xff]
        %v760 = vld [vmem:[#allocation2 + $0xc0] sm:$0xff]
        %v761 = vld [vmem:[#allocation2 + $0xc8] sm:$0xff]
        %v762 = vld [vmem:[#allocation2 + $0xd0] sm:$0xff]
        %v763 = vld [vmem:[#allocation2 + $0xd8] sm:$0xff]
        %v764 = vld [vmem:[#allocation2 + $0xe0] sm:$0xff]
        %v765 = vld [vmem:[#allocation2 + $0xe8] sm:$0xff]
        %v766 = vld [vmem:[#allocation2 + $0xf0] sm:$0xff]
        %v767 = vld [vmem:[#allocation2 + $0xf8] sm:$0xff]
        %v768 = vld [vmem:[%s3] sm:$0xff]
        %v769 = vld [vmem:[%s3 + $0x8] sm:$0xff]
        %v770 = vld [vmem:[%s3 + $0x10] sm:$0xff]
        %v771 = vld [vmem:[%s3 + $0x18] sm:$0xff]
        %v772 = vld [vmem:[%s3 + $0x20] sm:$0xff]
        %v773 = vld [vmem:[%s3 + $0x28] sm:$0xff]
        %v774 = vld [vmem:[%s3 + $0x30] sm:$0xff]
        %v775 = vld [vmem:[%s3 + $0x38] sm:$0xff]
        %v776 = vld [vmem:[%s3 + $0x40] sm:$0xff]
        %v777 = vld [vmem:[%s3 + $0x48] sm:$0xff]
        %v778 = vld [vmem:[%s3 + $0x50] sm:$0xff]
        %v779 = vld [vmem:[%s3 + $0x58] sm:$0xff]
        %v780 = vld [vmem:[%s3 + $0x60] sm:$0xff]
        %v781 = vld [vmem:[%s3 + $0x68] sm:$0xff]
        %v782 = vld [vmem:[%s3 + $0x70] sm:$0xff]
        %v783 = vld [vmem:[%s3 + $0x78] sm:$0xff]
        %v784 = vld [vmem:[%s3 + $0x80] sm:$0xff]
        %v785 = vld [vmem:[%s3 + $0x88] sm:$0xff]
        %v786 = vld [vmem:[%s3 + $0x90] sm:$0xff]
        %v787 = vld [vmem:[%s3 + $0x98] sm:$0xff]
        %v788 = vld [vmem:[%s3 + $0xa0] sm:$0xff]
        %v789 = vld [vmem:[%s3 + $0xa8] sm:$0xff]
        %v790 = vld [vmem:[%s3 + $0xb0] sm:$0xff]
        %v791 = vld [vmem:[%s3 + $0xb8] sm:$0xff]
        %v824 = vunpack.c.l.b16 %v736
        %v825 = vunpack.c.h.b16 %v736
        %v826 = vunpack.c.l.b16 %v737
        %v827 = vunpack.c.h.b16 %v737
        %v828 = vunpack.c.l.b16 %v738
        %v829 = vunpack.c.h.b16 %v738
        %v830 = vunpack.c.l.b16 %v739
        %v831 = vunpack.c.h.b16 %v739
        %v832 = vunpack.c.l.b16 %v740
        %v833 = vunpack.c.h.b16 %v740
        %v834 = vunpack.c.l.b16 %v741
        %v835 = vunpack.c.h.b16 %v741
        %v836 = vunpack.c.l.b16 %v742
        %v837 = vunpack.c.h.b16 %v742
        %v838 = vunpack.c.l.b16 %v743
        %v839 = vunpack.c.h.b16 %v743
        %v840 = vunpack.c.l.b16 %v744
        %v841 = vunpack.c.h.b16 %v744
        %v842 = vunpack.c.l.b16 %v745
        %v843 = vunpack.c.h.b16 %v745
        %v844 = vunpack.c.l.b16 %v746
        %v845 = vunpack.c.h.b16 %v746
        %v846 = vunpack.c.l.b16 %v747
        %v847 = vunpack.c.h.b16 %v747
        %v848 = vunpack.c.l.b16 %v748
        %v849 = vunpack.c.h.b16 %v748
        %v850 = vunpack.c.l.b16 %v749
        %v851 = vunpack.c.h.b16 %v749
        %v852 = vunpack.c.l.b16 %v750
        %v853 = vunpack.c.h.b16 %v750
        %v854 = vunpack.c.l.b16 %v751
        %v855 = vunpack.c.h.b16 %v751
        %v856 = vunpack.c.l.b16 %v752
        %v857 = vunpack.c.h.b16 %v752
        %v858 = vunpack.c.l.b16 %v753
        %v859 = vunpack.c.h.b16 %v753
        %v860 = vunpack.c.l.b16 %v754
        %v861 = vunpack.c.h.b16 %v754
        %v862 = vunpack.c.l.b16 %v755
        %v863 = vunpack.c.h.b16 %v755
        %v864 = vunpack.c.l.b16 %v756
        %v865 = vunpack.c.h.b16 %v756
        %v866 = vunpack.c.l.b16 %v757
        %v867 = vunpack.c.h.b16 %v757
        %v868 = vunpack.c.l.b16 %v758
        %v869 = vunpack.c.h.b16 %v758
        %v870 = vunpack.c.l.b16 %v759
        %v871 = vunpack.c.h.b16 %v759
        %v872 = vunpack.c.l.b16 %v760
        %v873 = vunpack.c.h.b16 %v760
        %v874 = vunpack.c.l.b16 %v761
        %v875 = vunpack.c.h.b16 %v761
        %v876 = vunpack.c.l.b16 %v762
        %v877 = vunpack.c.h.b16 %v762
        %v878 = vunpack.c.l.b16 %v763
        %v879 = vunpack.c.h.b16 %v763
        %v880 = vunpack.c.l.b16 %v764
        %v881 = vunpack.c.h.b16 %v764
        %v882 = vunpack.c.l.b16 %v765
        %v883 = vunpack.c.h.b16 %v765
        %v884 = vunpack.c.l.b16 %v766
        %v885 = vunpack.c.h.b16 %v766
        %v886 = vunpack.c.l.b16 %v767
        %v887 = vunpack.c.h.b16 %v767
        %v888 = vpack.c.b16 %v826, %v824
        %v889 = vpack.c.b16 %v827, %v825
        %v890 = vpack.c.b16 %v830, %v828
        %v891 = vpack.c.b16 %v831, %v829
        %v892 = vpack.c.b16 %v834, %v832
        %v893 = vpack.c.b16 %v835, %v833
        %v894 = vpack.c.b16 %v838, %v836
        %v895 = vpack.c.b16 %v839, %v837
        %v896 = vpack.c.b16 %v842, %v840
        %v897 = vpack.c.b16 %v843, %v841
        %v898 = vpack.c.b16 %v846, %v844
        %v899 = vpack.c.b16 %v847, %v845
        %v900 = vpack.c.b16 %v850, %v848
        %v901 = vpack.c.b16 %v851, %v849
        %v902 = vpack.c.b16 %v854, %v852
        %v903 = vpack.c.b16 %v855, %v853
        %v904 = vpack.c.b16 %v858, %v856
        %v905 = vpack.c.b16 %v859, %v857
        %v906 = vpack.c.b16 %v862, %v860
        %v907 = vpack.c.b16 %v863, %v861
        %v908 = vpack.c.b16 %v866, %v864
        %v909 = vpack.c.b16 %v867, %v865
        %v910 = vpack.c.b16 %v870, %v868
        %v911 = vpack.c.b16 %v871, %v869
        %v912 = vpack.c.b16 %v874, %v872
        %v913 = vpack.c.b16 %v875, %v873
        %v914 = vpack.c.b16 %v878, %v876
        %v915 = vpack.c.b16 %v879, %v877
        %v916 = vpack.c.b16 %v882, %v880
        %v917 = vpack.c.b16 %v883, %v881
        %v918 = vpack.c.b16 %v886, %v884
        %v919 = vpack.c.b16 %v887, %v885
        %v960 = vunpack.c.l.b16 %v768
        %v961 = vunpack.c.h.b16 %v768
        %v962 = vunpack.c.l.b16 %v769
        %v963 = vunpack.c.h.b16 %v769
        %v964 = vunpack.c.l.b16 %v770
        %v965 = vunpack.c.h.b16 %v770
        %v966 = vunpack.c.l.b16 %v771
        %v967 = vunpack.c.h.b16 %v771
        %v968 = vunpack.c.l.b16 %v772
        %v969 = vunpack.c.h.b16 %v772
        %v970 = vunpack.c.l.b16 %v773
        %v971 = vunpack.c.h.b16 %v773
        %v972 = vunpack.c.l.b16 %v774
        %v973 = vunpack.c.h.b16 %v774
        %v974 = vunpack.c.l.b16 %v775
        %v975 = vunpack.c.h.b16 %v775
        %v976 = vunpack.c.l.b16 %v776
        %v977 = vunpack.c.h.b16 %v776
        %v978 = vunpack.c.l.b16 %v777
        %v979 = vunpack.c.h.b16 %v777
        %v980 = vunpack.c.l.b16 %v778
        %v981 = vunpack.c.h.b16 %v778
        %v982 = vunpack.c.l.b16 %v779
        %v983 = vunpack.c.h.b16 %v779
        %v984 = vunpack.c.l.b16 %v780
        %v985 = vunpack.c.h.b16 %v780
        %v986 = vunpack.c.l.b16 %v781
        %v987 = vunpack.c.h.b16 %v781
        %v988 = vunpack.c.l.b16 %v782
        %v989 = vunpack.c.h.b16 %v782
        %v990 = vunpack.c.l.b16 %v783
        %v991 = vunpack.c.h.b16 %v783
        %v992 = vunpack.c.l.b16 %v784
        %v993 = vunpack.c.h.b16 %v784
        %v994 = vunpack.c.l.b16 %v785
        %v995 = vunpack.c.h.b16 %v785
        %v996 = vunpack.c.l.b16 %v786
        %v997 = vunpack.c.h.b16 %v786
        %v998 = vunpack.c.l.b16 %v787
        %v999 = vunpack.c.h.b16 %v787
        %v1000 = vunpack.c.l.b16 %v788
        %v1001 = vunpack.c.h.b16 %v788
        %v1002 = vunpack.c.l.b16 %v789
        %v1003 = vunpack.c.h.b16 %v789
        %v1004 = vunpack.c.l.b16 %v790
        %v1005 = vunpack.c.h.b16 %v790
        %v1006 = vunpack.c.l.b16 %v791
        %v1007 = vunpack.c.h.b16 %v791
        %v1008 = vpack.c.b16 %v962, %v960
        %v1009 = vpack.c.b16 %v963, %v961
        %v1010 = vpack.c.b16 %v966, %v964
        %v1011 = vpack.c.b16 %v967, %v965
        %v1012 = vpack.c.b16 %v970, %v968
        %v1013 = vpack.c.b16 %v971, %v969
        %v1014 = vpack.c.b16 %v974, %v972
        %v1015 = vpack.c.b16 %v975, %v973
        %v1016 = vpack.c.b16 %v978, %v976
        %v1017 = vpack.c.b16 %v979, %v977
        %v1018 = vpack.c.b16 %v982, %v980
        %v1019 = vpack.c.b16 %v983, %v981
        %v1020 = vpack.c.b16 %v986, %v984
        %v1021 = vpack.c.b16 %v987, %v985
        %v1022 = vpack.c.b16 %v990, %v988
        %v1023 = vpack.c.b16 %v991, %v989
        %v1024 = vpack.c.b16 %v994, %v992
        %v1025 = vpack.c.b16 %v995, %v993
        %v1026 = vpack.c.b16 %v998, %v996
        %v1027 = vpack.c.b16 %v999, %v997
        %v1028 = vpack.c.b16 %v1002, %v1000
        %v1029 = vpack.c.b16 %v1003, %v1001
        %v1030 = vpack.c.b16 %v1006, %v1004
        %v1031 = vpack.c.b16 %v1007, %v1005
        %vm1056 = vcmask 523264
        %v1058 = vsel %vm1056, %v889, 0
        %v1061 = vsel %vm1056, %v891, 0
        %v1064 = vsel %vm1056, %v893, 0
        %v1067 = vsel %vm1056, %v895, 0
        %v1070 = vsel %vm1056, %v897, 0
        %v1073 = vsel %vm1056, %v899, 0
        %v1076 = vsel %vm1056, %v901, 0
        %v1079 = vsel %vm1056, %v903, 0
        %v1082 = vsel %vm1056, %v905, 0
        %v1085 = vsel %vm1056, %v907, 0
        %v1088 = vsel %vm1056, %v909, 0
        %v1091 = vsel %vm1056, %v911, 0
        %v1094 = vsel %vm1056, %v913, 0
        %v1097 = vsel %vm1056, %v915, 0
        %v1100 = vsel %vm1056, %v917, 0
        %v1103 = vsel %vm1056, %v919, 0
        %1105 = vmatprep.subr.bf16.mxu0 %v1023
        %1106 = vmatpush1.bf16.msra.mxu0 %v1022
        %1107 = vmatprep.subr.bf16.mxu0 %v1021
        %1108 = vmatpush1.bf16.msra.mxu0 %v1020
        %1109 = vmatprep.subr.bf16.mxu0 %v1019
        %1110 = vmatpush1.bf16.msra.mxu0 %v1018
        %1111 = vmatprep.subr.bf16.mxu0 %v1017
        %1112 = vmatpush1.bf16.msra.mxu0 %v1016
        %1113 = vmatprep.subr.bf16.mxu0 %v1015
        %1114 = vmatpush1.bf16.msra.mxu0 %v1014
        %1115 = vmatprep.subr.bf16.mxu0 %v1013
        %1116 = vmatpush1.bf16.msra.mxu0 %v1012
        %1117 = vmatprep.subr.bf16.mxu0 %v1011
        %1118 = vmatpush1.bf16.msra.mxu0 %v1010
        %1119 = vmatprep.subr.bf16.mxu0 %v1009
        %1120 = vmatpush1.bf16.msra.mxu0 %v1008
        %1121 = vmatprep.subr.bf16.mxu0 0
        %1122 = vmatpush2.bf16.msra.mxu0 0
        %1123 = vmatprep.subr.bf16.mxu0 0
        %1124 = vmatpush2.bf16.msra.mxu0 0
        %1125 = vmatprep.subr.bf16.mxu0 0
        %1126 = vmatpush2.bf16.msra.mxu0 0
        %1127 = vmatprep.subr.bf16.mxu0 0
        %1128 = vmatpush2.bf16.msra.mxu0 0
        %1129 = vmatprep.subr.bf16.mxu0 %v1031
        %1130 = vmatpush2.bf16.msra.mxu0 %v1030
        %1131 = vmatprep.subr.bf16.mxu0 %v1029
        %1132 = vmatpush2.bf16.msra.mxu0 %v1028
        %1133 = vmatprep.subr.bf16.mxu0 %v1027
        %1134 = vmatpush2.bf16.msra.mxu0 %v1026
        %1135 = vmatprep.subr.bf16.mxu0 %v1025
        %1136 = vmatpush2.bf16.msra.mxu0 %v1024
        %1137 = vmatprep.mubr.bf16.mxu0 %v1058
        %1138 = vmatmul.mubr.bf16.gmra.mxu0 %v888
        %v1139 = vpop.f32.mrf.mxu0
        %v1140 = vadd.f32 0.0, %v1139
        %v1141 = vpop.f32.mrf.mxu0
        %v1142 = vadd.f32 0.0, %v1141
        %v1143 = vpop.f32.mrf.mxu0
        %v1144 = vadd.f32 0.0, %v1143
        %v1145 = vpop.f32.mrf.mxu0
        %v1146 = vadd.f32 0.0, %v1145
        %1147 = vmatprep.mubr.bf16.mxu0 %v1061
        %1148 = vmatmul.mubr.bf16.gmra.mxu0 %v890
        %v1149 = vpop.f32.mrf.mxu0
        %v1150 = vadd.f32 0.0, %v1149
        %v1151 = vpop.f32.mrf.mxu0
        %v1152 = vadd.f32 0.0, %v1151
        %v1153 = vpop.f32.mrf.mxu0
        %v1154 = vadd.f32 0.0, %v1153
        %v1155 = vpop.f32.mrf.mxu0
        %v1156 = vadd.f32 0.0, %v1155
        %1157 = vmatprep.mubr.bf16.mxu0 %v1064
        %1158 = vmatmul.mubr.bf16.gmra.mxu0 %v892
        %v1159 = vpop.f32.mrf.mxu0
        %v1160 = vadd.f32 0.0, %v1159
        %v1161 = vpop.f32.mrf.mxu0
        %v1162 = vadd.f32 0.0, %v1161
        %v1163 = vpop.f32.mrf.mxu0
        %v1164 = vadd.f32 0.0, %v1163
        %v1165 = vpop.f32.mrf.mxu0
        %v1166 = vadd.f32 0.0, %v1165
        %1167 = vmatprep.mubr.bf16.mxu0 %v1067
        %1168 = vmatmul.mubr.bf16.gmra.mxu0 %v894
        %v1169 = vpop.f32.mrf.mxu0
        %v1170 = vadd.f32 0.0, %v1169
        %v1171 = vpop.f32.mrf.mxu0
        %v1172 = vadd.f32 0.0, %v1171
        %v1173 = vpop.f32.mrf.mxu0
        %v1174 = vadd.f32 0.0, %v1173
        %v1175 = vpop.f32.mrf.mxu0
        %v1176 = vadd.f32 0.0, %v1175
        %1177 = vmatprep.mubr.bf16.mxu0 %v1070
        %1178 = vmatmul.mubr.bf16.gmra.mxu0 %v896
        %v1179 = vpop.f32.mrf.mxu0
        %v1180 = vadd.f32 0.0, %v1179
        %v1181 = vpop.f32.mrf.mxu0
        %v1182 = vadd.f32 0.0, %v1181
        %v1183 = vpop.f32.mrf.mxu0
        %v1184 = vadd.f32 0.0, %v1183
        %v1185 = vpop.f32.mrf.mxu0
        %v1186 = vadd.f32 0.0, %v1185
        %1187 = vmatprep.mubr.bf16.mxu0 %v1073
        %1188 = vmatmul.mubr.bf16.gmra.mxu0 %v898
        %v1189 = vpop.f32.mrf.mxu0
        %v1190 = vadd.f32 0.0, %v1189
        %v1191 = vpop.f32.mrf.mxu0
        %v1192 = vadd.f32 0.0, %v1191
        %v1193 = vpop.f32.mrf.mxu0
        %v1194 = vadd.f32 0.0, %v1193
        %v1195 = vpop.f32.mrf.mxu0
        %v1196 = vadd.f32 0.0, %v1195
        %1197 = vmatprep.mubr.bf16.mxu0 %v1076
        %1198 = vmatmul.mubr.bf16.gmra.mxu0 %v900
        %v1199 = vpop.f32.mrf.mxu0
        %v1200 = vadd.f32 0.0, %v1199
        %v1201 = vpop.f32.mrf.mxu0
        %v1202 = vadd.f32 0.0, %v1201
        %v1203 = vpop.f32.mrf.mxu0
        %v1204 = vadd.f32 0.0, %v1203
        %v1205 = vpop.f32.mrf.mxu0
        %v1206 = vadd.f32 0.0, %v1205
        %1207 = vmatprep.mubr.bf16.mxu0 %v1079
        %1208 = vmatmul.mubr.bf16.gmra.mxu0 %v902
        %v1209 = vpop.f32.mrf.mxu0
        %v1210 = vadd.f32 0.0, %v1209
        %v1211 = vpop.f32.mrf.mxu0
        %v1212 = vadd.f32 0.0, %v1211
        %v1213 = vpop.f32.mrf.mxu0
        %v1214 = vadd.f32 0.0, %v1213
        %v1215 = vpop.f32.mrf.mxu0
        %v1216 = vadd.f32 0.0, %v1215
        %1217 = vmatprep.mubr.bf16.mxu0 %v1082
        %1218 = vmatmul.mubr.bf16.gmra.mxu0 %v904
        %v1219 = vpop.f32.mrf.mxu0
        %v1220 = vadd.f32 0.0, %v1219
        %v1221 = vpop.f32.mrf.mxu0
        %v1222 = vadd.f32 0.0, %v1221
        %v1223 = vpop.f32.mrf.mxu0
        %v1224 = vadd.f32 0.0, %v1223
        %v1225 = vpop.f32.mrf.mxu0
        %v1226 = vadd.f32 0.0, %v1225
        %1227 = vmatprep.mubr.bf16.mxu0 %v1085
        %1228 = vmatmul.mubr.bf16.gmra.mxu0 %v906
        %v1229 = vpop.f32.mrf.mxu0
        %v1230 = vadd.f32 0.0, %v1229
        %v1231 = vpop.f32.mrf.mxu0
        %v1232 = vadd.f32 0.0, %v1231
        %v1233 = vpop.f32.mrf.mxu0
        %v1234 = vadd.f32 0.0, %v1233
        %v1235 = vpop.f32.mrf.mxu0
        %v1236 = vadd.f32 0.0, %v1235
        %1237 = vmatprep.mubr.bf16.mxu0 %v1088
        %1238 = vmatmul.mubr.bf16.gmra.mxu0 %v908
        %v1239 = vpop.f32.mrf.mxu0
        %v1240 = vadd.f32 0.0, %v1239
        %v1241 = vpop.f32.mrf.mxu0
        %v1242 = vadd.f32 0.0, %v1241
        %v1243 = vpop.f32.mrf.mxu0
        %v1244 = vadd.f32 0.0, %v1243
        %v1245 = vpop.f32.mrf.mxu0
        %v1246 = vadd.f32 0.0, %v1245
        %1247 = vmatprep.mubr.bf16.mxu0 %v1091
        %1248 = vmatmul.mubr.bf16.gmra.mxu0 %v910
        %v1249 = vpop.f32.mrf.mxu0
        %v1250 = vadd.f32 0.0, %v1249
        %v1251 = vpop.f32.mrf.mxu0
        %v1252 = vadd.f32 0.0, %v1251
        %v1253 = vpop.f32.mrf.mxu0
        %v1254 = vadd.f32 0.0, %v1253
        %v1255 = vpop.f32.mrf.mxu0
        %v1256 = vadd.f32 0.0, %v1255
        %1257 = vmatprep.mubr.bf16.mxu0 %v1094
        %1258 = vmatmul.mubr.bf16.gmra.mxu0 %v912
        %v1259 = vpop.f32.mrf.mxu0
        %v1260 = vadd.f32 0.0, %v1259
        %v1261 = vpop.f32.mrf.mxu0
        %v1262 = vadd.f32 0.0, %v1261
        %v1263 = vpop.f32.mrf.mxu0
        %v1264 = vadd.f32 0.0, %v1263
        %v1265 = vpop.f32.mrf.mxu0
        %v1266 = vadd.f32 0.0, %v1265
        %1267 = vmatprep.mubr.bf16.mxu0 %v1097
        %1268 = vmatmul.mubr.bf16.gmra.mxu0 %v914
        %v1269 = vpop.f32.mrf.mxu0
        %v1270 = vadd.f32 0.0, %v1269
        %v1271 = vpop.f32.mrf.mxu0
        %v1272 = vadd.f32 0.0, %v1271
        %v1273 = vpop.f32.mrf.mxu0
        %v1274 = vadd.f32 0.0, %v1273
        %v1275 = vpop.f32.mrf.mxu0
        %v1276 = vadd.f32 0.0, %v1275
        %1277 = vmatprep.mubr.bf16.mxu0 %v1100
        %1278 = vmatmul.mubr.bf16.gmra.mxu0 %v916
        %v1279 = vpop.f32.mrf.mxu0
        %v1280 = vadd.f32 0.0, %v1279
        %v1281 = vpop.f32.mrf.mxu0
        %v1282 = vadd.f32 0.0, %v1281
        %v1283 = vpop.f32.mrf.mxu0
        %v1284 = vadd.f32 0.0, %v1283
        %v1285 = vpop.f32.mrf.mxu0
        %v1286 = vadd.f32 0.0, %v1285
        %1287 = vmatprep.mubr.bf16.mxu0 %v1103
        %1288 = vmatmul.mubr.bf16.gmra.mxu0 %v918
        %v1289 = vpop.f32.mrf.mxu0
        %v1290 = vadd.f32 0.0, %v1289
        %v1291 = vpop.f32.mrf.mxu0
        %v1292 = vadd.f32 0.0, %v1291
        %v1293 = vpop.f32.mrf.mxu0
        %v1294 = vadd.f32 0.0, %v1293
        %v1295 = vpop.f32.mrf.mxu0
        %v1296 = vadd.f32 0.0, %v1295
        %1297 = vdwg.mxu0
        %1330 = vrot.lane.b32.xlu0 %v1140, 64
        %v1331 = vpop.permute.xlu0 %1330
        %1332 = vrot.lane.b32.xlu0 %v1144, 64
        %v1333 = vpop.permute.xlu0 %1332
        %1334 = vrot.lane.b32.xlu0 %v1150, 64
        %v1335 = vpop.permute.xlu0 %1334
        %1336 = vrot.lane.b32.xlu0 %v1154, 64
        %v1337 = vpop.permute.xlu0 %1336
        %1338 = vrot.lane.b32.xlu0 %v1160, 64
        %v1339 = vpop.permute.xlu0 %1338
        %1340 = vrot.lane.b32.xlu0 %v1164, 64
        %v1341 = vpop.permute.xlu0 %1340
        %1342 = vrot.lane.b32.xlu0 %v1170, 64
        %v1343 = vpop.permute.xlu0 %1342
        %1344 = vrot.lane.b32.xlu0 %v1174, 64
        %v1345 = vpop.permute.xlu0 %1344
        %1346 = vrot.lane.b32.xlu0 %v1180, 64
        %v1347 = vpop.permute.xlu0 %1346
        %1348 = vrot.lane.b32.xlu0 %v1184, 64
        %v1349 = vpop.permute.xlu0 %1348
        %1350 = vrot.lane.b32.xlu0 %v1190, 64
        %v1351 = vpop.permute.xlu0 %1350
        %1352 = vrot.lane.b32.xlu0 %v1194, 64
        %v1353 = vpop.permute.xlu0 %1352
        %1354 = vrot.lane.b32.xlu0 %v1200, 64
        %v1355 = vpop.permute.xlu0 %1354
        %1356 = vrot.lane.b32.xlu0 %v1204, 64
        %v1357 = vpop.permute.xlu0 %1356
        %1358 = vrot.lane.b32.xlu0 %v1210, 64
        %v1359 = vpop.permute.xlu0 %1358
        %1360 = vrot.lane.b32.xlu0 %v1214, 64
        %v1361 = vpop.permute.xlu0 %1360
        %1362 = vrot.lane.b32.xlu0 %v1220, 64
        %v1363 = vpop.permute.xlu0 %1362
        %1364 = vrot.lane.b32.xlu0 %v1224, 64
        %v1365 = vpop.permute.xlu0 %1364
        %1366 = vrot.lane.b32.xlu0 %v1230, 64
        %v1367 = vpop.permute.xlu0 %1366
        %1368 = vrot.lane.b32.xlu0 %v1234, 64
        %v1369 = vpop.permute.xlu0 %1368
        %1370 = vrot.lane.b32.xlu0 %v1240, 64
        %v1371 = vpop.permute.xlu0 %1370
        %1372 = vrot.lane.b32.xlu0 %v1244, 64
        %v1373 = vpop.permute.xlu0 %1372
        %1374 = vrot.lane.b32.xlu0 %v1250, 64
        %v1375 = vpop.permute.xlu0 %1374
        %1376 = vrot.lane.b32.xlu0 %v1254, 64
        %v1377 = vpop.permute.xlu0 %1376
        %1378 = vrot.lane.b32.xlu0 %v1260, 64
        %v1379 = vpop.permute.xlu0 %1378
        %1380 = vrot.lane.b32.xlu0 %v1264, 64
        %v1381 = vpop.permute.xlu0 %1380
        %1382 = vrot.lane.b32.xlu0 %v1270, 64
        %v1383 = vpop.permute.xlu0 %1382
        %1384 = vrot.lane.b32.xlu0 %v1274, 64
        %v1385 = vpop.permute.xlu0 %1384
        %1386 = vrot.lane.b32.xlu0 %v1280, 64
        %v1387 = vpop.permute.xlu0 %1386
        %1388 = vrot.lane.b32.xlu0 %v1284, 64
        %v1389 = vpop.permute.xlu0 %1388
        %1390 = vrot.lane.b32.xlu0 %v1290, 64
        %v1391 = vpop.permute.xlu0 %1390
        %1392 = vrot.lane.b32.xlu0 %v1294, 64
        %v1393 = vpop.permute.xlu0 %1392
        %1426 = vst.msk [vmem:[#allocation3] sm:$0xff] %vm1056, %v1331
        %1427 = vst.msk [vmem:[#allocation3 + $0x8] sm:$0xff] %vm1056, %v1333
        %1428 = vst.msk [vmem:[#allocation3 + $0x10] sm:$0xff] %vm1056, %v1335
        %1429 = vst.msk [vmem:[#allocation3 + $0x18] sm:$0xff] %vm1056, %v1337
        %1430 = vst.msk [vmem:[#allocation3 + $0x20] sm:$0xff] %vm1056, %v1339
        %1431 = vst.msk [vmem:[#allocation3 + $0x28] sm:$0xff] %vm1056, %v1341
        %1432 = vst.msk [vmem:[#allocation3 + $0x30] sm:$0xff] %vm1056, %v1343
        %1433 = vst.msk [vmem:[#allocation3 + $0x38] sm:$0xff] %vm1056, %v1345
        %1434 = vst.msk [vmem:[#allocation3 + $0x40] sm:$0xff] %vm1056, %v1347
        %1435 = vst.msk [vmem:[#allocation3 + $0x48] sm:$0xff] %vm1056, %v1349
        %1436 = vst.msk [vmem:[#allocation3 + $0x50] sm:$0xff] %vm1056, %v1351
        %1437 = vst.msk [vmem:[#allocation3 + $0x58] sm:$0xff] %vm1056, %v1353
        %1438 = vst.msk [vmem:[#allocation3 + $0x60] sm:$0xff] %vm1056, %v1355
        %1439 = vst.msk [vmem:[#allocation3 + $0x68] sm:$0xff] %vm1056, %v1357
        %1440 = vst.msk [vmem:[#allocation3 + $0x70] sm:$0xff] %vm1056, %v1359
        %1441 = vst.msk [vmem:[#allocation3 + $0x78] sm:$0xff] %vm1056, %v1361
        %1442 = vst.msk [vmem:[#allocation3 + $0x80] sm:$0xff] %vm1056, %v1363
        %1443 = vst.msk [vmem:[#allocation3 + $0x88] sm:$0xff] %vm1056, %v1365
        %1444 = vst.msk [vmem:[#allocation3 + $0x90] sm:$0xff] %vm1056, %v1367
        %1445 = vst.msk [vmem:[#allocation3 + $0x98] sm:$0xff] %vm1056, %v1369
        %1446 = vst.msk [vmem:[#allocation3 + $0xa0] sm:$0xff] %vm1056, %v1371
        %1447 = vst.msk [vmem:[#allocation3 + $0xa8] sm:$0xff] %vm1056, %v1373
        %1448 = vst.msk [vmem:[#allocation3 + $0xb0] sm:$0xff] %vm1056, %v1375
        %1449 = vst.msk [vmem:[#allocation3 + $0xb8] sm:$0xff] %vm1056, %v1377
        %1450 = vst.msk [vmem:[#allocation3 + $0xc0] sm:$0xff] %vm1056, %v1379
        %1451 = vst.msk [vmem:[#allocation3 + $0xc8] sm:$0xff] %vm1056, %v1381
        %1452 = vst.msk [vmem:[#allocation3 + $0xd0] sm:$0xff] %vm1056, %v1383
        %1453 = vst.msk [vmem:[#allocation3 + $0xd8] sm:$0xff] %vm1056, %v1385
        %1454 = vst.msk [vmem:[#allocation3 + $0xe0] sm:$0xff] %vm1056, %v1387
        %1455 = vst.msk [vmem:[#allocation3 + $0xe8] sm:$0xff] %vm1056, %v1389
        %1456 = vst.msk [vmem:[#allocation3 + $0xf0] sm:$0xff] %vm1056, %v1391
        %1457 = vst.msk [vmem:[#allocation3 + $0xf8] sm:$0xff] %vm1056, %v1393
        %v1458 = vld [vmem:[#allocation3 + $0x1] sm:$0xff]
        %v1459 = vld [vmem:[#allocation3 + $0x9] sm:$0x7f]
        %v1460 = vld [vmem:[#allocation3 + $0x11] sm:$0xff]
        %v1461 = vld [vmem:[#allocation3 + $0x19] sm:$0x7f]
        %v1462 = vld [vmem:[#allocation3 + $0x21] sm:$0xff]
        %v1463 = vld [vmem:[#allocation3 + $0x29] sm:$0x7f]
        %v1464 = vld [vmem:[#allocation3 + $0x31] sm:$0xff]
        %v1465 = vld [vmem:[#allocation3 + $0x39] sm:$0x7f]
        %v1466 = vld [vmem:[#allocation3 + $0x41] sm:$0xff]
        %v1467 = vld [vmem:[#allocation3 + $0x49] sm:$0x7f]
        %v1468 = vld [vmem:[#allocation3 + $0x51] sm:$0xff]
        %v1469 = vld [vmem:[#allocation3 + $0x59] sm:$0x7f]
        %v1470 = vld [vmem:[#allocation3 + $0x61] sm:$0xff]
        %v1471 = vld [vmem:[#allocation3 + $0x69] sm:$0x7f]
        %v1472 = vld [vmem:[#allocation3 + $0x71] sm:$0xff]
        %v1473 = vld [vmem:[#allocation3 + $0x79] sm:$0x7f]
        %v1474 = vld [vmem:[#allocation3 + $0x81] sm:$0xff]
        %v1475 = vld [vmem:[#allocation3 + $0x89] sm:$0x7f]
        %v1476 = vld [vmem:[#allocation3 + $0x91] sm:$0xff]
        %v1477 = vld [vmem:[#allocation3 + $0x99] sm:$0x7f]
        %v1478 = vld [vmem:[#allocation3 + $0xa1] sm:$0xff]
        %v1479 = vld [vmem:[#allocation3 + $0xa9] sm:$0x7f]
        %v1480 = vld [vmem:[#allocation3 + $0xb1] sm:$0xff]
        %v1481 = vld [vmem:[#allocation3 + $0xb9] sm:$0x7f]
        %v1482 = vld [vmem:[#allocation3 + $0xc1] sm:$0xff]
        %v1483 = vld [vmem:[#allocation3 + $0xc9] sm:$0x7f]
        %v1484 = vld [vmem:[#allocation3 + $0xd1] sm:$0xff]
        %v1485 = vld [vmem:[#allocation3 + $0xd9] sm:$0x7f]
        %v1486 = vld [vmem:[#allocation3 + $0xe1] sm:$0xff]
        %v1487 = vld [vmem:[#allocation3 + $0xe9] sm:$0x7f]
        %v1488 = vld [vmem:[#allocation3 + $0xf1] sm:$0xff]
        %v1489 = vld [vmem:[#allocation3 + $0xf9] sm:$0x7f]
        %v1490 = vadd.f32 %v1458, %v1140
        %v1491 = vadd.f32 %v1459, %v1144
        %v1492 = vadd.f32 %v1460, %v1150
        %v1493 = vadd.f32 %v1461, %v1154
        %v1494 = vadd.f32 %v1462, %v1160
        %v1495 = vadd.f32 %v1463, %v1164
        %v1496 = vadd.f32 %v1464, %v1170
        %v1497 = vadd.f32 %v1465, %v1174
        %v1498 = vadd.f32 %v1466, %v1180
        %v1499 = vadd.f32 %v1467, %v1184
        %v1500 = vadd.f32 %v1468, %v1190
        %v1501 = vadd.f32 %v1469, %v1194
        %v1502 = vadd.f32 %v1470, %v1200
        %v1503 = vadd.f32 %v1471, %v1204
        %v1504 = vadd.f32 %v1472, %v1210
        %v1505 = vadd.f32 %v1473, %v1214
        %v1506 = vadd.f32 %v1474, %v1220
        %v1507 = vadd.f32 %v1475, %v1224
        %v1508 = vadd.f32 %v1476, %v1230
        %v1509 = vadd.f32 %v1477, %v1234
        %v1510 = vadd.f32 %v1478, %v1240
        %v1511 = vadd.f32 %v1479, %v1244
        %v1512 = vadd.f32 %v1480, %v1250
        %v1513 = vadd.f32 %v1481, %v1254
        %v1514 = vadd.f32 %v1482, %v1260
        %v1515 = vadd.f32 %v1483, %v1264
        %v1516 = vadd.f32 %v1484, %v1270
        %v1517 = vadd.f32 %v1485, %v1274
        %v1518 = vadd.f32 %v1486, %v1280
        %v1519 = vadd.f32 %v1487, %v1284
        %v1520 = vadd.f32 %v1488, %v1290
        %v1521 = vadd.f32 %v1489, %v1294
        %1522 = vst.msk [vmem:[#allocation3 + $0x1] sm:$0xff] %vm1056, %v1490
        %vm1523 = vcmask 522240
        %1524 = vst.msk [vmem:[#allocation3 + $0x9] sm:$0x7f] %vm1523, %v1491
        %1525 = vst.msk [vmem:[#allocation3 + $0x11] sm:$0xff] %vm1056, %v1492
        %1526 = vst.msk [vmem:[#allocation3 + $0x19] sm:$0x7f] %vm1523, %v1493
        %1527 = vst.msk [vmem:[#allocation3 + $0x21] sm:$0xff] %vm1056, %v1494
        %1528 = vst.msk [vmem:[#allocation3 + $0x29] sm:$0x7f] %vm1523, %v1495
        %1529 = vst.msk [vmem:[#allocation3 + $0x31] sm:$0xff] %vm1056, %v1496
        %1530 = vst.msk [vmem:[#allocation3 + $0x39] sm:$0x7f] %vm1523, %v1497
        %1531 = vst.msk [vmem:[#allocation3 + $0x41] sm:$0xff] %vm1056, %v1498
        %1532 = vst.msk [vmem:[#allocation3 + $0x49] sm:$0x7f] %vm1523, %v1499
        %1533 = vst.msk [vmem:[#allocation3 + $0x51] sm:$0xff] %vm1056, %v1500
        %1534 = vst.msk [vmem:[#allocation3 + $0x59] sm:$0x7f] %vm1523, %v1501
        %1535 = vst.msk [vmem:[#allocation3 + $0x61] sm:$0xff] %vm1056, %v1502
        %1536 = vst.msk [vmem:[#allocation3 + $0x69] sm:$0x7f] %vm1523, %v1503
        %1537 = vst.msk [vmem:[#allocation3 + $0x71] sm:$0xff] %vm1056, %v1504
        %1538 = vst.msk [vmem:[#allocation3 + $0x79] sm:$0x7f] %vm1523, %v1505
        %1539 = vst.msk [vmem:[#allocation3 + $0x81] sm:$0xff] %vm1056, %v1506
        %1540 = vst.msk [vmem:[#allocation3 + $0x89] sm:$0x7f] %vm1523, %v1507
        %1541 = vst.msk [vmem:[#allocation3 + $0x91] sm:$0xff] %vm1056, %v1508
        %1542 = vst.msk [vmem:[#allocation3 + $0x99] sm:$0x7f] %vm1523, %v1509
        %1543 = vst.msk [vmem:[#allocation3 + $0xa1] sm:$0xff] %vm1056, %v1510
        %1544 = vst.msk [vmem:[#allocation3 + $0xa9] sm:$0x7f] %vm1523, %v1511
        %1545 = vst.msk [vmem:[#allocation3 + $0xb1] sm:$0xff] %vm1056, %v1512
        %1546 = vst.msk [vmem:[#allocation3 + $0xb9] sm:$0x7f] %vm1523, %v1513
        %1547 = vst.msk [vmem:[#allocation3 + $0xc1] sm:$0xff] %vm1056, %v1514
        %1548 = vst.msk [vmem:[#allocation3 + $0xc9] sm:$0x7f] %vm1523, %v1515
        %1549 = vst.msk [vmem:[#allocation3 + $0xd1] sm:$0xff] %vm1056, %v1516
        %1550 = vst.msk [vmem:[#allocation3 + $0xd9] sm:$0x7f] %vm1523, %v1517
        %1551 = vst.msk [vmem:[#allocation3 + $0xe1] sm:$0xff] %vm1056, %v1518
        %1552 = vst.msk [vmem:[#allocation3 + $0xe9] sm:$0x7f] %vm1523, %v1519
        %1553 = vst.msk [vmem:[#allocation3 + $0xf1] sm:$0xff] %vm1056, %v1520
        %1554 = vst.msk [vmem:[#allocation3 + $0xf9] sm:$0x7f] %vm1523, %v1521
        %v1555 = vld [vmem:[#allocation3] sm:$0xff]
        %v1556 = vld [vmem:[#allocation3 + $0x8] sm:$0x7f]
        %v1557 = vld [vmem:[#allocation3 + $0x10] sm:$0xff]
        %v1558 = vld [vmem:[#allocation3 + $0x18] sm:$0x7f]
        %v1559 = vld [vmem:[#allocation3 + $0x20] sm:$0xff]
        %v1560 = vld [vmem:[#allocation3 + $0x28] sm:$0x7f]
        %v1561 = vld [vmem:[#allocation3 + $0x30] sm:$0xff]
        %v1562 = vld [vmem:[#allocation3 + $0x38] sm:$0x7f]
        %v1563 = vld [vmem:[#allocation3 + $0x40] sm:$0xff]
        %v1564 = vld [vmem:[#allocation3 + $0x48] sm:$0x7f]
        %v1565 = vld [vmem:[#allocation3 + $0x50] sm:$0xff]
        %v1566 = vld [vmem:[#allocation3 + $0x58] sm:$0x7f]
        %v1567 = vld [vmem:[#allocation3 + $0x60] sm:$0xff]
        %v1568 = vld [vmem:[#allocation3 + $0x68] sm:$0x7f]
        %v1569 = vld [vmem:[#allocation3 + $0x70] sm:$0xff]
        %v1570 = vld [vmem:[#allocation3 + $0x78] sm:$0x7f]
        %v1571 = vld [vmem:[#allocation3 + $0x80] sm:$0xff]
        %v1572 = vld [vmem:[#allocation3 + $0x88] sm:$0x7f]
        %v1573 = vld [vmem:[#allocation3 + $0x90] sm:$0xff]
        %v1574 = vld [vmem:[#allocation3 + $0x98] sm:$0x7f]
        %v1575 = vld [vmem:[#allocation3 + $0xa0] sm:$0xff]
        %v1576 = vld [vmem:[#allocation3 + $0xa8] sm:$0x7f]
        %v1577 = vld [vmem:[#allocation3 + $0xb0] sm:$0xff]
        %v1578 = vld [vmem:[#allocation3 + $0xb8] sm:$0x7f]
        %v1579 = vld [vmem:[#allocation3 + $0xc0] sm:$0xff]
        %v1580 = vld [vmem:[#allocation3 + $0xc8] sm:$0x7f]
        %v1581 = vld [vmem:[#allocation3 + $0xd0] sm:$0xff]
        %v1582 = vld [vmem:[#allocation3 + $0xd8] sm:$0x7f]
        %v1583 = vld [vmem:[#allocation3 + $0xe0] sm:$0xff]
        %v1584 = vld [vmem:[#allocation3 + $0xe8] sm:$0x7f]
        %v1585 = vld [vmem:[#allocation3 + $0xf0] sm:$0xff]
        %v1586 = vld [vmem:[#allocation3 + $0xf8] sm:$0x7f]
        %vm1619 = vcmask 1046528
        %v1620 = vrot.slane %v1142, 1
        %v1621 = vrot.slane %v1146, 1
        %v1622 = vsel %vm1619, %v1620, %v1621
        %v1623 = vrot.slane %v1152, 1
        %v1624 = vrot.slane %v1156, 1
        %v1625 = vsel %vm1619, %v1623, %v1624
        %v1626 = vrot.slane %v1162, 1
        %v1627 = vrot.slane %v1166, 1
        %v1628 = vsel %vm1619, %v1626, %v1627
        %v1629 = vrot.slane %v1172, 1
        %v1630 = vrot.slane %v1176, 1
        %v1631 = vsel %vm1619, %v1629, %v1630
        %v1632 = vrot.slane %v1182, 1
        %v1633 = vrot.slane %v1186, 1
        %v1634 = vsel %vm1619, %v1632, %v1633
        %v1635 = vrot.slane %v1192, 1
        %v1636 = vrot.slane %v1196, 1
        %v1637 = vsel %vm1619, %v1635, %v1636
        %v1638 = vrot.slane %v1202, 1
        %v1639 = vrot.slane %v1206, 1
        %v1640 = vsel %vm1619, %v1638, %v1639
        %v1641 = vrot.slane %v1212, 1
        %v1642 = vrot.slane %v1216, 1
        %v1643 = vsel %vm1619, %v1641, %v1642
        %v1644 = vrot.slane %v1222, 1
        %v1645 = vrot.slane %v1226, 1
        %v1646 = vsel %vm1619, %v1644, %v1645
        %v1647 = vrot.slane %v1232, 1
        %v1648 = vrot.slane %v1236, 1
        %v1649 = vsel %vm1619, %v1647, %v1648
        %v1650 = vrot.slane %v1242, 1
        %v1651 = vrot.slane %v1246, 1
        %v1652 = vsel %vm1619, %v1650, %v1651
        %v1653 = vrot.slane %v1252, 1
        %v1654 = vrot.slane %v1256, 1
        %v1655 = vsel %vm1619, %v1653, %v1654
        %v1656 = vrot.slane %v1262, 1
        %v1657 = vrot.slane %v1266, 1
        %v1658 = vsel %vm1619, %v1656, %v1657
        %v1659 = vrot.slane %v1272, 1
        %v1660 = vrot.slane %v1276, 1
        %v1661 = vsel %vm1619, %v1659, %v1660
        %v1662 = vrot.slane %v1282, 1
        %v1663 = vrot.slane %v1286, 1
        %v1664 = vsel %vm1619, %v1662, %v1663
        %v1665 = vrot.slane %v1292, 1
        %v1666 = vrot.slane %v1296, 1
        %v1667 = vsel %vm1619, %v1665, %v1666
        %v1700 = vadd.f32 %v1555, %v1622
        %v1701 = vadd.f32 %v1556, %v1621
        %v1702 = vadd.f32 %v1557, %v1625
        %v1703 = vadd.f32 %v1558, %v1624
        %v1704 = vadd.f32 %v1559, %v1628
        %v1705 = vadd.f32 %v1560, %v1627
        %v1706 = vadd.f32 %v1561, %v1631
        %v1707 = vadd.f32 %v1562, %v1630
        %v1708 = vadd.f32 %v1563, %v1634
        %v1709 = vadd.f32 %v1564, %v1633
        %v1710 = vadd.f32 %v1565, %v1637
        %v1711 = vadd.f32 %v1566, %v1636
        %v1712 = vadd.f32 %v1567, %v1640
        %v1713 = vadd.f32 %v1568, %v1639
        %v1714 = vadd.f32 %v1569, %v1643
        %v1715 = vadd.f32 %v1570, %v1642
        %v1716 = vadd.f32 %v1571, %v1646
        %v1717 = vadd.f32 %v1572, %v1645
        %v1718 = vadd.f32 %v1573, %v1649
        %v1719 = vadd.f32 %v1574, %v1648
        %v1720 = vadd.f32 %v1575, %v1652
        %v1721 = vadd.f32 %v1576, %v1651
        %v1722 = vadd.f32 %v1577, %v1655
        %v1723 = vadd.f32 %v1578, %v1654
        %v1724 = vadd.f32 %v1579, %v1658
        %v1725 = vadd.f32 %v1580, %v1657
        %v1726 = vadd.f32 %v1581, %v1661
        %v1727 = vadd.f32 %v1582, %v1660
        %v1728 = vadd.f32 %v1583, %v1664
        %v1729 = vadd.f32 %v1584, %v1663
        %v1730 = vadd.f32 %v1585, %v1667
        %v1731 = vadd.f32 %v1586, %v1666
        %1732 = vst.msk [vmem:[#allocation3] sm:$0xff] %vm1056, %v1700
        %1733 = vst.msk [vmem:[#allocation3 + $0x8] sm:$0x7f] %vm1523, %v1701
        %1734 = vst.msk [vmem:[#allocation3 + $0x10] sm:$0xff] %vm1056, %v1702
        %1735 = vst.msk [vmem:[#allocation3 + $0x18] sm:$0x7f] %vm1523, %v1703
        %1736 = vst.msk [vmem:[#allocation3 + $0x20] sm:$0xff] %vm1056, %v1704
        %1737 = vst.msk [vmem:[#allocation3 + $0x28] sm:$0x7f] %vm1523, %v1705
        %1738 = vst.msk [vmem:[#allocation3 + $0x30] sm:$0xff] %vm1056, %v1706
        %1739 = vst.msk [vmem:[#allocation3 + $0x38] sm:$0x7f] %vm1523, %v1707
        %1740 = vst.msk [vmem:[#allocation3 + $0x40] sm:$0xff] %vm1056, %v1708
        %1741 = vst.msk [vmem:[#allocation3 + $0x48] sm:$0x7f] %vm1523, %v1709
        %1742 = vst.msk [vmem:[#allocation3 + $0x50] sm:$0xff] %vm1056, %v1710
        %1743 = vst.msk [vmem:[#allocation3 + $0x58] sm:$0x7f] %vm1523, %v1711
        %1744 = vst.msk [vmem:[#allocation3 + $0x60] sm:$0xff] %vm1056, %v1712
        %1745 = vst.msk [vmem:[#allocation3 + $0x68] sm:$0x7f] %vm1523, %v1713
        %1746 = vst.msk [vmem:[#allocation3 + $0x70] sm:$0xff] %vm1056, %v1714
        %1747 = vst.msk [vmem:[#allocation3 + $0x78] sm:$0x7f] %vm1523, %v1715
        %1748 = vst.msk [vmem:[#allocation3 + $0x80] sm:$0xff] %vm1056, %v1716
        %1749 = vst.msk [vmem:[#allocation3 + $0x88] sm:$0x7f] %vm1523, %v1717
        %1750 = vst.msk [vmem:[#allocation3 + $0x90] sm:$0xff] %vm1056, %v1718
        %1751 = vst.msk [vmem:[#allocation3 + $0x98] sm:$0x7f] %vm1523, %v1719
        %1752 = vst.msk [vmem:[#allocation3 + $0xa0] sm:$0xff] %vm1056, %v1720
        %1753 = vst.msk [vmem:[#allocation3 + $0xa8] sm:$0x7f] %vm1523, %v1721
        %1754 = vst.msk [vmem:[#allocation3 + $0xb0] sm:$0xff] %vm1056, %v1722
        %1755 = vst.msk [vmem:[#allocation3 + $0xb8] sm:$0x7f] %vm1523, %v1723
        %1756 = vst.msk [vmem:[#allocation3 + $0xc0] sm:$0xff] %vm1056, %v1724
        %1757 = vst.msk [vmem:[#allocation3 + $0xc8] sm:$0x7f] %vm1523, %v1725
        %1758 = vst.msk [vmem:[#allocation3 + $0xd0] sm:$0xff] %vm1056, %v1726
        %1759 = vst.msk [vmem:[#allocation3 + $0xd8] sm:$0x7f] %vm1523, %v1727
        %1760 = vst.msk [vmem:[#allocation3 + $0xe0] sm:$0xff] %vm1056, %v1728
        %1761 = vst.msk [vmem:[#allocation3 + $0xe8] sm:$0x7f] %vm1523, %v1729
        %1762 = vst.msk [vmem:[#allocation3 + $0xf0] sm:$0xff] %vm1056, %v1730
        %1763 = vst.msk [vmem:[#allocation3 + $0xf8] sm:$0x7f] %vm1523, %v1731
        %v1764 = vld [vmem:[#allocation3] sm:$0xff]
        %v1765 = vld [vmem:[#allocation3 + $0x8] sm:$0xff]
        %v1766 = vld [vmem:[#allocation3 + $0x10] sm:$0xff]
        %v1767 = vld [vmem:[#allocation3 + $0x18] sm:$0xff]
        %v1768 = vld [vmem:[#allocation3 + $0x20] sm:$0xff]
        %v1769 = vld [vmem:[#allocation3 + $0x28] sm:$0xff]
        %v1770 = vld [vmem:[#allocation3 + $0x30] sm:$0xff]
        %v1771 = vld [vmem:[#allocation3 + $0x38] sm:$0xff]
        %v1772 = vld [vmem:[#allocation3 + $0x40] sm:$0xff]
        %v1773 = vld [vmem:[#allocation3 + $0x48] sm:$0xff]
        %v1774 = vld [vmem:[#allocation3 + $0x50] sm:$0xff]
        %v1775 = vld [vmem:[#allocation3 + $0x58] sm:$0xff]
        %v1776 = vld [vmem:[#allocation3 + $0x60] sm:$0xff]
        %v1777 = vld [vmem:[#allocation3 + $0x68] sm:$0xff]
        %v1778 = vld [vmem:[#allocation3 + $0x70] sm:$0xff]
        %v1779 = vld [vmem:[#allocation3 + $0x78] sm:$0xff]
        %v1780 = vld [vmem:[#allocation3 + $0x80] sm:$0xff]
        %v1781 = vld [vmem:[#allocation3 + $0x88] sm:$0xff]
        %v1782 = vld [vmem:[#allocation3 + $0x90] sm:$0xff]
        %v1783 = vld [vmem:[#allocation3 + $0x98] sm:$0xff]
        %v1784 = vld [vmem:[#allocation3 + $0xa0] sm:$0xff]
        %v1785 = vld [vmem:[#allocation3 + $0xa8] sm:$0xff]
        %v1786 = vld [vmem:[#allocation3 + $0xb0] sm:$0xff]
        %v1787 = vld [vmem:[#allocation3 + $0xb8] sm:$0xff]
        %v1788 = vld [vmem:[#allocation3 + $0xc0] sm:$0xff]
        %v1789 = vld [vmem:[#allocation3 + $0xc8] sm:$0xff]
        %v1790 = vld [vmem:[#allocation3 + $0xd0] sm:$0xff]
        %v1791 = vld [vmem:[#allocation3 + $0xd8] sm:$0xff]
        %v1792 = vld [vmem:[#allocation3 + $0xe0] sm:$0xff]
        %v1793 = vld [vmem:[#allocation3 + $0xe8] sm:$0xff]
        %v1794 = vld [vmem:[#allocation3 + $0xf0] sm:$0xff]
        %v1795 = vld [vmem:[#allocation3 + $0xf8] sm:$0xff]
        %v1796 = vmax.f32 %v1764, 0.0
        %v1797 = vmax.f32 %v1765, 0.0
        %v1798 = vmax.f32 %v1766, 0.0
        %v1799 = vmax.f32 %v1767, 0.0
        %v1800 = vmax.f32 %v1768, 0.0
        %v1801 = vmax.f32 %v1769, 0.0
        %v1802 = vmax.f32 %v1770, 0.0
        %v1803 = vmax.f32 %v1771, 0.0
        %v1804 = vmax.f32 %v1772, 0.0
        %v1805 = vmax.f32 %v1773, 0.0
        %v1806 = vmax.f32 %v1774, 0.0
        %v1807 = vmax.f32 %v1775, 0.0
        %v1808 = vmax.f32 %v1776, 0.0
        %v1809 = vmax.f32 %v1777, 0.0
        %v1810 = vmax.f32 %v1778, 0.0
        %v1811 = vmax.f32 %v1779, 0.0
        %v1812 = vmax.f32 %v1780, 0.0
        %v1813 = vmax.f32 %v1781, 0.0
        %v1814 = vmax.f32 %v1782, 0.0
        %v1815 = vmax.f32 %v1783, 0.0
        %v1816 = vmax.f32 %v1784, 0.0
        %v1817 = vmax.f32 %v1785, 0.0
        %v1818 = vmax.f32 %v1786, 0.0
        %v1819 = vmax.f32 %v1787, 0.0
        %v1820 = vmax.f32 %v1788, 0.0
        %v1821 = vmax.f32 %v1789, 0.0
        %v1822 = vmax.f32 %v1790, 0.0
        %v1823 = vmax.f32 %v1791, 0.0
        %v1824 = vmax.f32 %v1792, 0.0
        %v1825 = vmax.f32 %v1793, 0.0
        %v1826 = vmax.f32 %v1794, 0.0
        %v1827 = vmax.f32 %v1795, 0.0
        %1828 = vst.msk [vmem:[%s307] sm:$0xff] %vm1056, %v1796
        %1829 = vst.msk [vmem:[%s307 + $0x8] sm:$0xff] %vm1056, %v1797
        %1830 = vst.msk [vmem:[%s307 + $0x10] sm:$0xff] %vm1056, %v1798
        %1831 = vst.msk [vmem:[%s307 + $0x18] sm:$0xff] %vm1056, %v1799
        %1832 = vst.msk [vmem:[%s307 + $0x20] sm:$0xff] %vm1056, %v1800
        %1833 = vst.msk [vmem:[%s307 + $0x28] sm:$0xff] %vm1056, %v1801
        %1834 = vst.msk [vmem:[%s307 + $0x30] sm:$0xff] %vm1056, %v1802
        %1835 = vst.msk [vmem:[%s307 + $0x38] sm:$0xff] %vm1056, %v1803
        %1836 = vst.msk [vmem:[%s307 + $0x40] sm:$0xff] %vm1056, %v1804
        %1837 = vst.msk [vmem:[%s307 + $0x48] sm:$0xff] %vm1056, %v1805
        %1838 = vst.msk [vmem:[%s307 + $0x50] sm:$0xff] %vm1056, %v1806
        %1839 = vst.msk [vmem:[%s307 + $0x58] sm:$0xff] %vm1056, %v1807
        %1840 = vst.msk [vmem:[%s307 + $0x60] sm:$0xff] %vm1056, %v1808
        %1841 = vst.msk [vmem:[%s307 + $0x68] sm:$0xff] %vm1056, %v1809
        %1842 = vst.msk [vmem:[%s307 + $0x70] sm:$0xff] %vm1056, %v1810
        %1843 = vst.msk [vmem:[%s307 + $0x78] sm:$0xff] %vm1056, %v1811
        %1844 = vst.msk [vmem:[%s307 + $0x80] sm:$0xff] %vm1056, %v1812
        %1845 = vst.msk [vmem:[%s307 + $0x88] sm:$0xff] %vm1056, %v1813
        %1846 = vst.msk [vmem:[%s307 + $0x90] sm:$0xff] %vm1056, %v1814
        %1847 = vst.msk [vmem:[%s307 + $0x98] sm:$0xff] %vm1056, %v1815
        %1848 = vst.msk [vmem:[%s307 + $0xa0] sm:$0xff] %vm1056, %v1816
        %1849 = vst.msk [vmem:[%s307 + $0xa8] sm:$0xff] %vm1056, %v1817
        %1850 = vst.msk [vmem:[%s307 + $0xb0] sm:$0xff] %vm1056, %v1818
        %1851 = vst.msk [vmem:[%s307 + $0xb8] sm:$0xff] %vm1056, %v1819
        %1852 = vst.msk [vmem:[%s307 + $0xc0] sm:$0xff] %vm1056, %v1820
        %1853 = vst.msk [vmem:[%s307 + $0xc8] sm:$0xff] %vm1056, %v1821
        %1854 = vst.msk [vmem:[%s307 + $0xd0] sm:$0xff] %vm1056, %v1822
        %1855 = vst.msk [vmem:[%s307 + $0xd8] sm:$0xff] %vm1056, %v1823
        %1856 = vst.msk [vmem:[%s307 + $0xe0] sm:$0xff] %vm1056, %v1824
        %1857 = vst.msk [vmem:[%s307 + $0xe8] sm:$0xff] %vm1056, %v1825
        %1858 = vst.msk [vmem:[%s307 + $0xf0] sm:$0xff] %vm1056, %v1826
        %1859 = vst.msk [vmem:[%s307 + $0xf8] sm:$0xff] %vm1056, %v1827
        %s1860 = sand.u32 %s161, 1
        %s1861 = scalar_lea.sflag [#allocation5], %s1860
        %s1862 = sand.u32 %s161, 1
        %s1863 = smul.addr %s1862, 256
        %s1864 = scalar_lea.vmem [#allocation4], %s1863
        // Predicated region
        $region37: #{conv_relu_block.1} parent=35 // pred_check
          %p1865 = pneg %p171
        $region38: #{conv_relu_block.1} parent=35 // pred_check_branch
          %1867 = sbr.rel (%p1865) target = $region40
        $region39: #{conv_relu_block.1} parent=35 // pred_region
          %s1868 = smul.u32 16, %s23
          %s1870 = ssub.s32 4096, 4096
          %1871 = vsyncadd %s1861, %s1870
          %s1872 = smul.addr %s1868, 2
          %s1873 = smul.addr %s22, 32
          %s1874 = sadd.s32 %s1872, %s1873
          %s1875 = smul.addr %s1874, 128
          %s1876 = scalar_lea.hbm %s4, %s1875
          %s1877 = sshll.u32 %s1864, 4
          %s1878 = int_to_ptr.vmem [resolvable:$true] %s1877
          %1883 = dma.vmem_to_hbm [thread:$0]  %s1878, 4096, %s1876, %s1861, 128, 128, 8
        $region40: #{conv_relu_block.1} parent=35 // pred_fallthru
          _
      $region36: #{conv_relu_block.1} parent=5 // pred_fallthru
        _
      %p1884 = scmp.le.s32.totalorder 2, %s13
      // Predicated region
      $region41: #{conv_relu_block.1} parent=5 // pred_check
        %p1885 = pneg %p1884
      $region42: #{conv_relu_block.1} parent=5 // pred_check_branch
        %1887 = sbr.rel (%p1885) target = $region44
      $region43: #{conv_relu_block.1} parent=5 // pred_region
        %s1888 = ssub.s32 %s13, 2
        // Predicated region
        $region45: #{conv_relu_block.1} parent=43 // pred_check
          %p1889 = pneg %p177
        $region46: #{conv_relu_block.1} parent=43 // pred_check_branch
          %1891 = sbr.rel (%p1889) target = $region48
        $region47: #{conv_relu_block.1} parent=43 // pred_region
          %s1892 = sand.u32 %s162, 1
          %s1893 = scalar_lea.sflag [#allocation5], %s1892
          %s1894 = sand.u32 %s162, 1
          %s1895 = smul.addr %s1894, 256
          %s1896 = scalar_lea.vmem [#allocation4], %s1895
          %1897 = dma.done %s1893, 4096
        $region48: #{conv_relu_block.1} parent=43 // pred_fallthru
          _
      $region44: #{conv_relu_block.1} parent=5 // pred_fallthru
        _
    $region6: #{conv_relu_block.1} parent=1 // loop_footer
      %s17 = sadd.s32 1, %s13
    $region7: #{conv_relu_block.1} parent=1 // loop_footer_branch
      %12 = sbr.rel target = $region3
    $region8: #{conv_relu_block.1} parent=1 // loop_exit
      _
    %1898 = vsyncpa [#allocation5], 1
    %s1899 = scalar_lea.sflag [#allocation5], 1
    %1900 = vsyncpa %s1899, 1

</llo_original>
